<compile_context>
chip_gen: v7x
topology: tpu7x:2x2x1
jax: 0.10.0
libtpu: 0.0.40
codegen_flags: <defaults>
</compile_context>

<pallas_src>
import math
from typing import NamedTuple

import jax
import jax.numpy as jnp
from jax.experimental import pallas as pl
from jax.experimental.pallas import tpu as pltpu


def _round_up(x, m):
    return (x + m - 1) // m * m


class PackedMeta(NamedTuple):
    g: int        # rows packed per "wide" row
    din: int      # input_dim = Dx + 1 (x features + folded-in y)
    hidden: int
    tag: int      # true tag_size
    tag_pad: int  # tag_size padded to a divisor of 128 (or multiple of 128)


def _choose_group(tag_pad, hidden):
    """Rows packed per wide row: aim for 128 output lanes per packed row."""
    if tag_pad >= 128 or 128 % tag_pad != 0:
        return 1
    g = 128 // tag_pad
    # Keep the block-diagonal lin2 weight (g*hidden)^2 small enough for VMEM.
    while g > 1 and g * hidden > 1024:
        g //= 2
    return g


def pack_params(params, *, compute_dtype=jnp.bfloat16):
    """Build the block-diagonal ("group-packed") weights ONCE and cache them.

    params = (w1, b1, w2, b2, w3, b3) with weights stored (in, out).
    Returns (packed_arrays, PackedMeta).  Call once; reuse for every forward.
    """
    w1, b1, w2, b2, w3, b3 = params
    din, hidden = w1.shape
    tag = w3.shape[1]

    # Pad the output width to a divisor of 128 so the packed output slab is
    # always 128-lane dense (avoids masked stores / lane-sparse matmuls).
    if tag <= 128:
        tag_pad = max(1, pl.next_power_of_2(tag))
    else:
        tag_pad = _round_up(tag, 128)
    g = _choose_group(tag_pad, hidden)

    w3p = jnp.pad(w3, ((0, 0), (0, tag_pad - tag)))
    b3p = jnp.pad(b3, (0, tag_pad - tag))

    eye = jnp.eye(g, dtype=jnp.float32)
    w1_blk = jnp.kron(eye, w1.astype(jnp.float32)).astype(compute_dtype)  # (g*din,    g*hidden)
    w2_blk = jnp.kron(eye, w2.astype(jnp.float32)).astype(compute_dtype)  # (g*hidden, g*hidden)
    w3_blk = jnp.kron(eye, w3p.astype(jnp.float32)).astype(compute_dtype) # (g*hidden, g*tag_pad)
    b1_blk = jnp.tile(b1.astype(jnp.float32), g)[None, :]                 # (1, g*hidden) f32
    b2_blk = jnp.tile(b2.astype(jnp.float32), g)[None, :]
    b3_blk = jnp.tile(b3p.astype(jnp.float32), g)[None, :]                # (1, g*tag_pad)

    packed = (w1_blk, b1_blk, w2_blk, b2_blk, w3_blk, b3_blk)
    return packed, PackedMeta(g=g, din=din, hidden=hidden, tag=tag, tag_pad=tag_pad)


def _mlp_kernel(x_ref, w1_ref, b1_ref, w2_ref, b2_ref, w3_ref, b3_ref, o_ref):
    # x: (TILE_G, g*din) bf16; weights block-diagonal (in, out) bf16;
    # biases (1, out) f32 broadcast over the tile.  bf16 MXU, f32 accumulate.
    h = jnp.dot(x_ref[...], w1_ref[...], preferred_element_type=jnp.float32)
    h = jnp.maximum(h + b1_ref[...], 0.0)            # lin1 + ReLU (drop1 = id, eval)
    h = jnp.dot(h.astype(w2_ref.dtype), w2_ref[...],
                preferred_element_type=jnp.float32)
    h = jnp.maximum(h + b2_ref[...], 0.0)            # lin2 + ReLU (drop2 = id, eval)
    r = jnp.dot(h.astype(w3_ref.dtype), w3_ref[...],
                preferred_element_type=jnp.float32) + b3_ref[...]
    o_ref[...] = r.astype(o_ref.dtype)               # lin3


def xyenc_mlp_forward(x_hat, y, packed, meta, *, tile_g=1024):
    """x_hat: (B, S, Dx) f32, y: (B, S) f32.  Returns (B, S, tag_size) f32."""
    w1_blk, b1_blk, w2_blk, b2_blk, w3_blk, b3_blk = packed
    g, din, hidden, tag, tag_pad = meta
    B, S, Dx = x_hat.shape
    assert din == Dx + 1, "packed params were built for a different input_dim"

    rows = B * S
    R = pl.cdiv(rows, g)                 # packed ("wide") rows

    # Tile sizing: large tiles amortize the ~0.35us per-grid-step overhead;
    # for small row counts shrink the tile so the grid still has >=2 steps
    # (v7x has 2 TensorCores; a 1-step 'parallel' grid leaves one idle) and
    # padding stays minimal.
    tile_g = _round_up(max(8, tile_g), 8)
    tile_g = max(8, min(tile_g, _round_up(pl.cdiv(R, 2), 8)))
    R_pad = _round_up(R, tile_g)
    rows_pad = R_pad * g

    # Fold y in as the last per-group feature and pack g rows per wide row.
    # concat + pad + bf16 cast + reshape fuse into a single slab write in the
    # wrapper; the kernel then streams one lane-dense bf16 activation input.
    xy = jnp.concatenate([jnp.reshape(x_hat, (rows, Dx)),
                          jnp.reshape(y, (rows, 1))], axis=1)      # (rows, din)
    xy = jnp.pad(xy, ((0, rows_pad - rows), (0, 0))).astype(w1_blk.dtype)
    x_pack = jnp.reshape(xy, (R_pad, g * din))

    # Grid-invariant specs: DMA'd once, VMEM-resident, single-buffered.
    pinned = lambda shape: pl.BlockSpec(shape, lambda i: (0, 0),
                                        pipeline_mode=pl.Buffered(1))

    grid = (R_pad // tile_g,)
    out_pack = pl.pallas_call(
        _mlp_kernel,
        out_shape=jax.ShapeDtypeStruct((R_pad, g * tag_pad), jnp.float32),
        grid=grid,
        in_specs=[
            pl.BlockSpec((tile_g, g * din), lambda i: (i, 0)),   # activations: tiled
            pinned((g * din, g * hidden)),                       # lin1 weight
            pinned((1, g * hidden)),                             # lin1 bias
            pinned((g * hidden, g * hidden)),                    # lin2 weight
            pinned((1, g * hidden)),                             # lin2 bias
            pinned((g * hidden, g * tag_pad)),                   # lin3 weight
            pinned((1, g * tag_pad)),                            # lin3 bias
        ],
        out_specs=pl.BlockSpec((tile_g, g * tag_pad), lambda i: (i, 0)),
        compiler_params=pltpu.CompilerParams(
            dimension_semantics=("parallel",)),
    )(x_pack, w1_blk, b1_blk, w2_blk, b2_blk, w3_blk, b3_blk)

    out = jnp.reshape(out_pack, (rows_pad, tag_pad))[:rows, :tag]
    return jnp.reshape(out, (B, S, tag))


def init_params(key, input_dim, hidden_size, tag_size):
    """Deterministic init mimicking nn.Linear shapes; stored as (in, out)."""
    ks = jax.random.split(key, 6)

    def lin(kw, kb, fan_in, fan_out):
        bound = 1.0 / math.sqrt(fan_in)
        w = jax.random.uniform(kw, (fan_in, fan_out), jnp.float32, -bound, bound)
        b = jax.random.uniform(kb, (fan_out,), jnp.float32, -bound, bound)
        return w, b

    w1, b1 = lin(ks[0], ks[1], input_dim, hidden_size)
    w2, b2 = lin(ks[2], ks[3], hidden_size, hidden_size)
    w3, b3 = lin(ks[4], ks[5], hidden_size, tag_size)
    return (w1, b1, w2, b2, w3, b3)


if __name__ == "__main__":
    key = jax.random.PRNGKey(0)
    k_x, k_y, k_p, k_x2, k_y2 = jax.random.split(key, 5)

    Dx = 15                  # x_hat feature dim
    input_dim = Dx + 1       # after (implicit) concat with y
    hidden_size = 32
    tag_size = 8
    params = init_params(k_p, input_dim, hidden_size, tag_size)

    # Pack the block-diagonal bf16 weights ONCE; reuse for every call.
    packed, meta = pack_params(params)
    packed = jax.tree_util.tree_map(jax.block_until_ready, packed)

    def reference(x_hat, y, params):
        w1, b1, w2, b2, w3, b3 = params
        h = jnp.concatenate([x_hat, y[..., None]], axis=2)
        h = jnp.maximum(h @ w1 + b1, 0.0)
        h = jnp.maximum(h @ w2 + b2, 0.0)
        return h @ w3 + b3

    # Case 1: small module-consistent shape (single grid step).
    B, S = 2, 8
    x_hat = jax.random.normal(k_x, (B, S, Dx), jnp.float32)
    y = jax.random.normal(k_y, (B, S), jnp.float32)
    out = jax.block_until_ready(xyenc_mlp_forward(x_hat, y, packed, meta))
    ref = reference(x_hat, y, params)
    assert out.shape == (B, S, tag_size)
    # bf16 matmul operands (f32 accumulate) -> allow a small tolerance.
    assert jnp.allclose(out, ref, atol=2e-2, rtol=2e-2), \
        float(jnp.max(jnp.abs(out - ref)))

    # Case 2: rows not a multiple of the packing group (exercises padding) and
    # a multi-step grid (exercises the single-buffered resident weights).
    B2, S2 = 3, 43           # rows = 129
    x_hat2 = jax.random.normal(k_x2, (B2, S2, Dx), jnp.float32)
    y2 = jax.random.normal(k_y2, (B2, S2), jnp.float32)
    out2 = jax.block_until_ready(xyenc_mlp_forward(x_hat2, y2, packed, meta))
    ref2 = reference(x_hat2, y2, params)
    assert out2.shape == (B2, S2, tag_size)
    assert jnp.allclose(out2, ref2, atol=2e-2, rtol=2e-2), \
        float(jnp.max(jnp.abs(out2 - ref2)))

    # TODO(synk): training-mode Dropout (stochastic masking via pltpu.prng_*)
    # is intentionally not implemented; forward matches model.eval().
    print("KERNEL_OK")
</pallas_src>

<mosaic_0001>
module attributes {stable_mosaic.version = 11 : i64} {
  func.func @_mlp_kernel(%arg0: i32, %arg1: memref<8x256xbf16, #tpu.memory_space<vmem>>, %arg2: memref<256x512xbf16, #tpu.memory_space<vmem>>, %arg3: memref<1x512xf32, #tpu.memory_space<vmem>>, %arg4: memref<512x512xbf16, #tpu.memory_space<vmem>>, %arg5: memref<1x512xf32, #tpu.memory_space<vmem>>, %arg6: memref<512x128xbf16, #tpu.memory_space<vmem>>, %arg7: memref<1x128xf32, #tpu.memory_space<vmem>>, %arg8: memref<8x128xf32, #tpu.memory_space<vmem>>) attributes {dimension_semantics = [#tpu.dimension_semantics<parallel>], iteration_bounds = array<i64: 1>, scalar_prefetch = 0 : i64, scratch_operands = 0 : i64, tpu.core_type = #tpu.core_type<tc>, window_params = [{transform_indices = @transform_0, window_bounds = array<i64: 8, 256>}, {pipeline_mode = #tpu.pipeline_mode<synchronous>, transform_indices = @transform_1, window_bounds = array<i64: 256, 512>}, {pipeline_mode = #tpu.pipeline_mode<synchronous>, transform_indices = @transform_2, window_bounds = array<i64: 1, 512>}, {pipeline_mode = #tpu.pipeline_mode<synchronous>, transform_indices = @transform_3, window_bounds = array<i64: 512, 512>}, {pipeline_mode = #tpu.pipeline_mode<synchronous>, transform_indices = @transform_4, window_bounds = array<i64: 1, 512>}, {pipeline_mode = #tpu.pipeline_mode<synchronous>, transform_indices = @transform_5, window_bounds = array<i64: 512, 128>}, {pipeline_mode = #tpu.pipeline_mode<synchronous>, transform_indices = @transform_6, window_bounds = array<i64: 1, 128>}, {transform_indices = @transform_7, window_bounds = array<i64: 8, 128>}]} {
    %c0 = arith.constant 0 : index
    %c0_0 = arith.constant 0 : index
    %0 = vector.load %arg1[%c0, %c0_0] : memref<8x256xbf16, #tpu.memory_space<vmem>>, vector<8x256xbf16>
    %c0_1 = arith.constant 0 : index
    %c0_2 = arith.constant 0 : index
    %1 = vector.load %arg2[%c0_1, %c0_2] : memref<256x512xbf16, #tpu.memory_space<vmem>>, vector<256x512xbf16>
    %cst = arith.constant dense<0.000000e+00> : vector<8x512xf32>
    %2 = tpu.matmul %0, %1, %cst {dimension_numbers = #tpu.dot_dimension_numbers<[1], [0], [0], [1], [0, 0, 1, 1], [], []>} : vector<8x256xbf16>, vector<256x512xbf16>, vector<8x512xf32> -> vector<8x512xf32>
    %c0_3 = arith.constant 0 : index
    %c0_4 = arith.constant 0 : index
    %3 = vector.load %arg3[%c0_3, %c0_4] : memref<1x512xf32, #tpu.memory_space<vmem>>, vector<1x512xf32>
    %4 = vector.broadcast %3 : vector<1x512xf32> to vector<8x512xf32>
    %5 = arith.addf %2, %4 : vector<8x512xf32>
    %cst_5 = arith.constant 0.000000e+00 : f32
    %6 = vector.broadcast %cst_5 : f32 to vector<8x512xf32>
    %7 = arith.maximumf %5, %6 : vector<8x512xf32>
    %8 = arith.truncf %7 : vector<8x512xf32> to vector<8x512xbf16>
    %c0_6 = arith.constant 0 : index
    %c0_7 = arith.constant 0 : index
    %9 = vector.load %arg4[%c0_6, %c0_7] : memref<512x512xbf16, #tpu.memory_space<vmem>>, vector<512x512xbf16>
    %cst_8 = arith.constant dense<0.000000e+00> : vector<8x512xf32>
    %10 = tpu.matmul %8, %9, %cst_8 {dimension_numbers = #tpu.dot_dimension_numbers<[1], [0], [0], [1], [0, 0, 1, 1], [], []>} : vector<8x512xbf16>, vector<512x512xbf16>, vector<8x512xf32> -> vector<8x512xf32>
    %c0_9 = arith.constant 0 : index
    %c0_10 = arith.constant 0 : index
    %11 = vector.load %arg5[%c0_9, %c0_10] : memref<1x512xf32, #tpu.memory_space<vmem>>, vector<1x512xf32>
    %12 = vector.broadcast %11 : vector<1x512xf32> to vector<8x512xf32>
    %13 = arith.addf %10, %12 : vector<8x512xf32>
    %cst_11 = arith.constant 0.000000e+00 : f32
    %14 = vector.broadcast %cst_11 : f32 to vector<8x512xf32>
    %15 = arith.maximumf %13, %14 : vector<8x512xf32>
    %16 = arith.truncf %15 : vector<8x512xf32> to vector<8x512xbf16>
    %c0_12 = arith.constant 0 : index
    %c0_13 = arith.constant 0 : index
    %17 = vector.load %arg6[%c0_12, %c0_13] : memref<512x128xbf16, #tpu.memory_space<vmem>>, vector<512x128xbf16>
    %cst_14 = arith.constant dense<0.000000e+00> : vector<8x128xf32>
    %18 = tpu.matmul %16, %17, %cst_14 {dimension_numbers = #tpu.dot_dimension_numbers<[1], [0], [0], [1], [0, 0, 1, 1], [], []>} : vector<8x512xbf16>, vector<512x128xbf16>, vector<8x128xf32> -> vector<8x128xf32>
    %c0_15 = arith.constant 0 : index
    %c0_16 = arith.constant 0 : index
    %19 = vector.load %arg7[%c0_15, %c0_16] : memref<1x128xf32, #tpu.memory_space<vmem>>, vector<1x128xf32>
    %20 = vector.broadcast %19 : vector<1x128xf32> to vector<8x128xf32>
    %21 = arith.addf %18, %20 : vector<8x128xf32>
    %c0_17 = arith.constant 0 : index
    %c0_18 = arith.constant 0 : index
    %22 = vector.load %arg8[%c0_17, %c0_18] : memref<8x128xf32, #tpu.memory_space<vmem>>, vector<8x128xf32>
    tpu.vector_store %arg8[%c0_17, %c0_18], %21 {strides = array<i32>} : memref<8x128xf32, #tpu.memory_space<vmem>>, vector<8x128xf32>,
    return
  }
  func.func @transform_0(%arg0: i32) -> (i32, i32) {
    %c0_i32 = arith.constant 0 : i32
    %c0_i32_0 = arith.constant 0 : i32
    return %arg0, %c0_i32 : i32, i32
  }
  func.func @transform_1(%arg0: i32) -> (i32, i32) {
    %c0_i32 = arith.constant 0 : i32
    %c0_i32_0 = arith.constant 0 : i32
    %c0_i32_1 = arith.constant 0 : i32
    return %c0_i32, %c0_i32_0 : i32, i32
  }
  func.func @transform_2(%arg0: i32) -> (i32, i32) {
    %c0_i32 = arith.constant 0 : i32
    %c0_i32_0 = arith.constant 0 : i32
    %c0_i32_1 = arith.constant 0 : i32
    return %c0_i32, %c0_i32_0 : i32, i32
  }
  func.func @transform_3(%arg0: i32) -> (i32, i32) {
    %c0_i32 = arith.constant 0 : i32
    %c0_i32_0 = arith.constant 0 : i32
    %c0_i32_1 = arith.constant 0 : i32
    return %c0_i32, %c0_i32_0 : i32, i32
  }
  func.func @transform_4(%arg0: i32) -> (i32, i32) {
    %c0_i32 = arith.constant 0 : i32
    %c0_i32_0 = arith.constant 0 : i32
    %c0_i32_1 = arith.constant 0 : i32
    return %c0_i32, %c0_i32_0 : i32, i32
  }
  func.func @transform_5(%arg0: i32) -> (i32, i32) {
    %c0_i32 = arith.constant 0 : i32
    %c0_i32_0 = arith.constant 0 : i32
    %c0_i32_1 = arith.constant 0 : i32
    return %c0_i32, %c0_i32_0 : i32, i32
  }
  func.func @transform_6(%arg0: i32) -> (i32, i32) {
    %c0_i32 = arith.constant 0 : i32
    %c0_i32_0 = arith.constant 0 : i32
    %c0_i32_1 = arith.constant 0 : i32
    return %c0_i32, %c0_i32_0 : i32, i32
  }
  func.func @transform_7(%arg0: i32) -> (i32, i32) {
    %c0_i32 = arith.constant 0 : i32
    %c0_i32_0 = arith.constant 0 : i32
    return %arg0, %c0_i32 : i32, i32
  }
}

</mosaic_0001>

<llo_original>
// kernel: tpu_custom_call.1
$region0: #{tpu_custom_call.1}
  #allocation0 [shape = 'u32[]', space=smem, size = 0x4, offset = 0x4, fixed_abs, tag = 'smem constant byte address 0x4 - core index']
  #allocation1 [shape = 'u32[144,128]{1,0:T(1,128)}', space=vmem, size = 0x12000, scoped, tag = 'internal scratch']
  %s0 = inlined_call_operand.hbm [shape: bf16[8,256], index: 0, kind: input, shape index: {}]
  %s1 = inlined_call_operand.hbm [shape: bf16[256,512], index: 1, kind: input, shape index: {}]
  %s2 = inlined_call_operand.vmem [shape: f32[1,512], index: 2, kind: input, shape index: {}]
  %s3 = inlined_call_operand.hbm [shape: bf16[512,512], index: 3, kind: input, shape index: {}]
  %s4 = inlined_call_operand.vmem [shape: f32[1,512], index: 4, kind: input, shape index: {}]
  %s5 = inlined_call_operand.hbm [shape: bf16[512,128], index: 5, kind: input, shape index: {}]
  %s6 = inlined_call_operand.vmem [shape: f32[1,128], index: 6, kind: input, shape index: {}]
  %s7 = inlined_call_operand.hbm [shape: f32[8,128], index: 7, kind: output, shape index: {}]
  %s8 = sld [smem:[#allocation0]]
  $region54: #{tpu_custom_call.1} parent=0
    _
  %s10 = ssub.s32 1, %s8
  %s11 = scalar_select 0, %s10, %s8
  $region1: #{tpu_custom_call.1} parent=0
    #allocation2 [shape = 'u8[4096]{0}', space=vmem, size = 0x1000, scoped, tag = 'input window, operand 0, single buffered']
    #allocation3 [shape = 's32[1]{0}', space=sflag, size = 0x4, scoped, tag = 'scoped memory for tpu_custom_call.1']
    #allocation4 [shape = 's32[1]{0}', space=sflag, size = 0x4, scoped, tag = 'scoped memory for tpu_custom_call.1']
    #allocation5 [shape = 'u8[262144]{0}', space=vmem, size = 0x40000, scoped, tag = 'input window, operand 1, single buffered']
    #allocation6 [shape = 's32[1]{0}', space=sflag, size = 0x4, scoped, tag = 'scoped memory for tpu_custom_call.1']
    #allocation7 [shape = 'u8[524288]{0}', space=vmem, size = 0x80000, scoped, tag = 'input window, operand 3, single buffered']
    #allocation8 [shape = 'u8[131072]{0}', space=vmem, size = 0x20000, scoped, tag = 'input window, operand 5, single buffered']
    #allocation9 [shape = 's32[1]{0}', space=sflag, size = 0x4, scoped, tag = 'scoped memory for tpu_custom_call.1']
    #allocation10 [shape = 'u8[4096]{0}', space=vmem, size = 0x1000, scoped, tag = 'output window, operand 0, single buffered']
    %12 = vsyncpa [#allocation3], 0
    %13 = vsyncpa [#allocation6], 0
    %14 = vsyncpa [#allocation9], 0
    %15 = vsyncpa [#allocation4], 0
    // Predicated region
    $region2: #{tpu_custom_call.1} parent=1 // pred_check
      _
    $region3: #{tpu_custom_call.1} parent=1 // pred_check_branch
      %17 = sbr.rel (0) target = $region5
    $region4: #{tpu_custom_call.1} parent=1 // pred_region
      %s19 = ssub.s32 128, 128
      %20 = vsyncadd [#allocation3], %s19
      %s22 = sshll.u32 [#allocation2], 4
      %s23 = int_to_ptr.vmem [resolvable:$true] %s22
      %25 = dma.hbm_to_vmem [thread:$0]  %s0, 128, %s23, [#allocation3]
    $region5: #{tpu_custom_call.1} parent=1 // pred_fallthru
      _
    // Predicated region
    $region6: #{tpu_custom_call.1} parent=1 // pred_check
      _
    $region7: #{tpu_custom_call.1} parent=1 // pred_check_branch
      %27 = sbr.rel (0) target = $region9
    $region8: #{tpu_custom_call.1} parent=1 // pred_region
      %s29 = ssub.s32 8192, 8192
      %30 = vsyncadd [#allocation6], %s29
      %s31 = sshll.u32 [#allocation5], 4
      %s32 = int_to_ptr.vmem [resolvable:$true] %s31
      %37 = dma.hbm_to_vmem [thread:$0]  %s1, 8192, %s32, [#allocation6], 256, 256, 16
    $region9: #{tpu_custom_call.1} parent=1 // pred_fallthru
      _
    // Predicated region
    $region10: #{tpu_custom_call.1} parent=1 // pred_check
      _
    $region11: #{tpu_custom_call.1} parent=1 // pred_check_branch
      %39 = sbr.rel (0) target = $region13
    $region12: #{tpu_custom_call.1} parent=1 // pred_region
      _
    $region13: #{tpu_custom_call.1} parent=1 // pred_fallthru
      _
    // Predicated region
    $region14: #{tpu_custom_call.1} parent=1 // pred_check
      _
    $region15: #{tpu_custom_call.1} parent=1 // pred_check_branch
      %41 = sbr.rel (0) target = $region17
    $region16: #{tpu_custom_call.1} parent=1 // pred_region
      %s43 = ssub.s32 16384, 16384
      %44 = vsyncadd [#allocation6], %s43
      %s45 = sshll.u32 [#allocation7], 4
      %s46 = int_to_ptr.vmem [resolvable:$true] %s45
      %51 = dma.hbm_to_vmem [thread:$0]  %s3, 16384, %s46, [#allocation6], 256, 256, 16
    $region17: #{tpu_custom_call.1} parent=1 // pred_fallthru
      _
    // Predicated region
    $region18: #{tpu_custom_call.1} parent=1 // pred_check
      _
    $region19: #{tpu_custom_call.1} parent=1 // pred_check_branch
      %53 = sbr.rel (0) target = $region21
    $region20: #{tpu_custom_call.1} parent=1 // pred_region
      _
    $region21: #{tpu_custom_call.1} parent=1 // pred_fallthru
      _
    // Predicated region
    $region22: #{tpu_custom_call.1} parent=1 // pred_check
      _
    $region23: #{tpu_custom_call.1} parent=1 // pred_check_branch
      %55 = sbr.rel (0) target = $region25
    $region24: #{tpu_custom_call.1} parent=1 // pred_region
      %s57 = ssub.s32 4096, 4096
      %58 = vsyncadd [#allocation9], %s57
      %s59 = sshll.u32 [#allocation8], 4
      %s60 = int_to_ptr.vmem [resolvable:$true] %s59
      %65 = dma.hbm_to_vmem [thread:$0]  %s5, 4096, %s60, [#allocation9], 64, 64, 4
    $region25: #{tpu_custom_call.1} parent=1 // pred_fallthru
      _
    // Predicated region
    $region26: #{tpu_custom_call.1} parent=1 // pred_check
      _
    $region27: #{tpu_custom_call.1} parent=1 // pred_check_branch
      %67 = sbr.rel (0) target = $region29
    $region28: #{tpu_custom_call.1} parent=1 // pred_region
      _
    $region29: #{tpu_custom_call.1} parent=1 // pred_fallthru
      _
    // Predicated region
    $region30: #{tpu_custom_call.1} parent=1 // pred_check
      _
    $region31: #{tpu_custom_call.1} parent=1 // pred_check_branch
      %69 = sbr.rel (0) target = $region33
    $region32: #{tpu_custom_call.1} parent=1 // pred_region
      %70 = dma.done [#allocation3], 128
    $region33: #{tpu_custom_call.1} parent=1 // pred_fallthru
      _
    // Predicated region
    $region34: #{tpu_custom_call.1} parent=1 // pred_check
      _
    $region35: #{tpu_custom_call.1} parent=1 // pred_check_branch
      %72 = sbr.rel (0) target = $region37
    $region36: #{tpu_custom_call.1} parent=1 // pred_region
      %73 = dma.done [#allocation6], 8192
    $region37: #{tpu_custom_call.1} parent=1 // pred_fallthru
      _
    // Predicated region
    $region38: #{tpu_custom_call.1} parent=1 // pred_check
      _
    $region39: #{tpu_custom_call.1} parent=1 // pred_check_branch
      %75 = sbr.rel (0) target = $region41
    $region40: #{tpu_custom_call.1} parent=1 // pred_region
      %76 = dma.done [#allocation6], 16384
    $region41: #{tpu_custom_call.1} parent=1 // pred_fallthru
      _
    // Predicated region
    $region42: #{tpu_custom_call.1} parent=1 // pred_check
      _
    $region43: #{tpu_custom_call.1} parent=1 // pred_check_branch
      %78 = sbr.rel (0) target = $region45
    $region44: #{tpu_custom_call.1} parent=1 // pred_region
      %79 = dma.done [#allocation9], 4096
    $region45: #{tpu_custom_call.1} parent=1 // pred_fallthru
      _
    %v81 = vld [vmem:[#allocation2] sm:$0xff]
    %v82 = vld [vmem:[#allocation5] sm:$0xff]
    %v83 = vld [vmem:[#allocation5 + $0x8] sm:$0xff]
    %v84 = vld [vmem:[#allocation5 + $0x10] sm:$0xff]
    %v85 = vld [vmem:[#allocation5 + $0x18] sm:$0xff]
    %v86 = vld [vmem:[#allocation5 + $0x20] sm:$0xff]
    %v87 = vld [vmem:[#allocation5 + $0x28] sm:$0xff]
    %v88 = vld [vmem:[#allocation5 + $0x30] sm:$0xff]
    %v89 = vld [vmem:[#allocation5 + $0x38] sm:$0xff]
    %v90 = vld [vmem:[#allocation5 + $0x40] sm:$0xff]
    %v91 = vld [vmem:[#allocation5 + $0x48] sm:$0xff]
    %v92 = vld [vmem:[#allocation5 + $0x50] sm:$0xff]
    %v93 = vld [vmem:[#allocation5 + $0x58] sm:$0xff]
    %v94 = vld [vmem:[#allocation5 + $0x60] sm:$0xff]
    %v95 = vld [vmem:[#allocation5 + $0x68] sm:$0xff]
    %v96 = vld [vmem:[#allocation5 + $0x70] sm:$0xff]
    %v97 = vld [vmem:[#allocation5 + $0x78] sm:$0xff]
    %v98 = vld [vmem:[#allocation5 + $0x80] sm:$0xff]
    %v99 = vld [vmem:[#allocation5 + $0x88] sm:$0xff]
    %v100 = vld [vmem:[#allocation5 + $0x90] sm:$0xff]
    %v101 = vld [vmem:[#allocation5 + $0x98] sm:$0xff]
    %v102 = vld [vmem:[#allocation5 + $0xa0] sm:$0xff]
    %v103 = vld [vmem:[#allocation5 + $0xa8] sm:$0xff]
    %v104 = vld [vmem:[#allocation5 + $0xb0] sm:$0xff]
    %v105 = vld [vmem:[#allocation5 + $0xb8] sm:$0xff]
    %v106 = vld [vmem:[#allocation5 + $0xc0] sm:$0xff]
    %v107 = vld [vmem:[#allocation5 + $0xc8] sm:$0xff]
    %v108 = vld [vmem:[#allocation5 + $0xd0] sm:$0xff]
    %v109 = vld [vmem:[#allocation5 + $0xd8] sm:$0xff]
    %v110 = vld [vmem:[#allocation5 + $0xe0] sm:$0xff]
    %v111 = vld [vmem:[#allocation5 + $0xe8] sm:$0xff]
    %v112 = vld [vmem:[#allocation5 + $0xf0] sm:$0xff]
    %v113 = vld [vmem:[#allocation5 + $0xf8] sm:$0xff]
    %v114 = vld [vmem:[#allocation5 + $0x100] sm:$0xff]
    %v115 = vld [vmem:[#allocation5 + $0x108] sm:$0xff]
    %v116 = vld [vmem:[#allocation5 + $0x110] sm:$0xff]
    %v117 = vld [vmem:[#allocation5 + $0x118] sm:$0xff]
    %v118 = vld [vmem:[#allocation5 + $0x120] sm:$0xff]
    %v119 = vld [vmem:[#allocation5 + $0x128] sm:$0xff]
    %v120 = vld [vmem:[#allocation5 + $0x130] sm:$0xff]
    %v121 = vld [vmem:[#allocation5 + $0x138] sm:$0xff]
    %v122 = vld [vmem:[#allocation5 + $0x140] sm:$0xff]
    %v123 = vld [vmem:[#allocation5 + $0x148] sm:$0xff]
    %v124 = vld [vmem:[#allocation5 + $0x150] sm:$0xff]
    %v125 = vld [vmem:[#allocation5 + $0x158] sm:$0xff]
    %v126 = vld [vmem:[#allocation5 + $0x160] sm:$0xff]
    %v127 = vld [vmem:[#allocation5 + $0x168] sm:$0xff]
    %v128 = vld [vmem:[#allocation5 + $0x170] sm:$0xff]
    %v129 = vld [vmem:[#allocation5 + $0x178] sm:$0xff]
    %v130 = vld [vmem:[#allocation5 + $0x180] sm:$0xff]
    %v131 = vld [vmem:[#allocation5 + $0x188] sm:$0xff]
    %v132 = vld [vmem:[#allocation5 + $0x190] sm:$0xff]
    %v133 = vld [vmem:[#allocation5 + $0x198] sm:$0xff]
    %v134 = vld [vmem:[#allocation5 + $0x1a0] sm:$0xff]
    %v135 = vld [vmem:[#allocation5 + $0x1a8] sm:$0xff]
    %v136 = vld [vmem:[#allocation5 + $0x1b0] sm:$0xff]
    %v137 = vld [vmem:[#allocation5 + $0x1b8] sm:$0xff]
    %v138 = vld [vmem:[#allocation5 + $0x1c0] sm:$0xff]
    %v139 = vld [vmem:[#allocation5 + $0x1c8] sm:$0xff]
    %v140 = vld [vmem:[#allocation5 + $0x1d0] sm:$0xff]
    %v141 = vld [vmem:[#allocation5 + $0x1d8] sm:$0xff]
    %v142 = vld [vmem:[#allocation5 + $0x1e0] sm:$0xff]
    %v143 = vld [vmem:[#allocation5 + $0x1e8] sm:$0xff]
    %v144 = vld [vmem:[#allocation5 + $0x1f0] sm:$0xff]
    %v145 = vld [vmem:[#allocation5 + $0x1f8] sm:$0xff]
    %v146 = vld [vmem:[%s2] sm:$0xf]
    %v148 = vlaneseq
    %v149 = vshrl.u32 %v148, 7
    %v150 = vsub.s32 0, %v149
    %v151 = vrot.slane %v146, %v150
    %v152 = vlaneseq
    %v153 = vshrl.u32 %v152, 7
    %v154 = vsub.s32 1, %v153
    %v155 = vrot.slane %v146, %v154
    %v156 = vlaneseq
    %v157 = vshrl.u32 %v156, 7
    %v158 = vsub.s32 2, %v157
    %v159 = vrot.slane %v146, %v158
    %v160 = vlaneseq
    %v161 = vshrl.u32 %v160, 7
    %v162 = vsub.s32 3, %v161
    %v163 = vrot.slane %v146, %v162
    %v169 = vunpack.c.l.b16 %v81
    %v170 = vunpack.c.h.b16 %v81
    %v171 = vpack.c.b16 %v169, %v169
    %v172 = vpack.c.b16 %v170, %v170
    %v239 = vunpack.c.l.b16 %v82
    %v240 = vunpack.c.h.b16 %v82
    %v241 = vunpack.c.l.b16 %v83
    %v242 = vunpack.c.h.b16 %v83
    %v243 = vunpack.c.l.b16 %v84
    %v244 = vunpack.c.h.b16 %v84
    %v245 = vunpack.c.l.b16 %v85
    %v246 = vunpack.c.h.b16 %v85
    %v247 = vunpack.c.l.b16 %v86
    %v248 = vunpack.c.h.b16 %v86
    %v249 = vunpack.c.l.b16 %v87
    %v250 = vunpack.c.h.b16 %v87
    %v251 = vunpack.c.l.b16 %v88
    %v252 = vunpack.c.h.b16 %v88
    %v253 = vunpack.c.l.b16 %v89
    %v254 = vunpack.c.h.b16 %v89
    %v255 = vunpack.c.l.b16 %v90
    %v256 = vunpack.c.h.b16 %v90
    %v257 = vunpack.c.l.b16 %v91
    %v258 = vunpack.c.h.b16 %v91
    %v259 = vunpack.c.l.b16 %v92
    %v260 = vunpack.c.h.b16 %v92
    %v261 = vunpack.c.l.b16 %v93
    %v262 = vunpack.c.h.b16 %v93
    %v263 = vunpack.c.l.b16 %v94
    %v264 = vunpack.c.h.b16 %v94
    %v265 = vunpack.c.l.b16 %v95
    %v266 = vunpack.c.h.b16 %v95
    %v267 = vunpack.c.l.b16 %v96
    %v268 = vunpack.c.h.b16 %v96
    %v269 = vunpack.c.l.b16 %v97
    %v270 = vunpack.c.h.b16 %v97
    %v271 = vunpack.c.l.b16 %v98
    %v272 = vunpack.c.h.b16 %v98
    %v273 = vunpack.c.l.b16 %v99
    %v274 = vunpack.c.h.b16 %v99
    %v275 = vunpack.c.l.b16 %v100
    %v276 = vunpack.c.h.b16 %v100
    %v277 = vunpack.c.l.b16 %v101
    %v278 = vunpack.c.h.b16 %v101
    %v279 = vunpack.c.l.b16 %v102
    %v280 = vunpack.c.h.b16 %v102
    %v281 = vunpack.c.l.b16 %v103
    %v282 = vunpack.c.h.b16 %v103
    %v283 = vunpack.c.l.b16 %v104
    %v284 = vunpack.c.h.b16 %v104
    %v285 = vunpack.c.l.b16 %v105
    %v286 = vunpack.c.h.b16 %v105
    %v287 = vunpack.c.l.b16 %v106
    %v288 = vunpack.c.h.b16 %v106
    %v289 = vunpack.c.l.b16 %v107
    %v290 = vunpack.c.h.b16 %v107
    %v291 = vunpack.c.l.b16 %v108
    %v292 = vunpack.c.h.b16 %v108
    %v293 = vunpack.c.l.b16 %v109
    %v294 = vunpack.c.h.b16 %v109
    %v295 = vunpack.c.l.b16 %v110
    %v296 = vunpack.c.h.b16 %v110
    %v297 = vunpack.c.l.b16 %v111
    %v298 = vunpack.c.h.b16 %v111
    %v299 = vunpack.c.l.b16 %v112
    %v300 = vunpack.c.h.b16 %v112
    %v301 = vunpack.c.l.b16 %v113
    %v302 = vunpack.c.h.b16 %v113
    %v303 = vunpack.c.l.b16 %v114
    %v304 = vunpack.c.h.b16 %v114
    %v305 = vunpack.c.l.b16 %v115
    %v306 = vunpack.c.h.b16 %v115
    %v307 = vunpack.c.l.b16 %v116
    %v308 = vunpack.c.h.b16 %v116
    %v309 = vunpack.c.l.b16 %v117
    %v310 = vunpack.c.h.b16 %v117
    %v311 = vunpack.c.l.b16 %v118
    %v312 = vunpack.c.h.b16 %v118
    %v313 = vunpack.c.l.b16 %v119
    %v314 = vunpack.c.h.b16 %v119
    %v315 = vunpack.c.l.b16 %v120
    %v316 = vunpack.c.h.b16 %v120
    %v317 = vunpack.c.l.b16 %v121
    %v318 = vunpack.c.h.b16 %v121
    %v319 = vunpack.c.l.b16 %v122
    %v320 = vunpack.c.h.b16 %v122
    %v321 = vunpack.c.l.b16 %v123
    %v322 = vunpack.c.h.b16 %v123
    %v323 = vunpack.c.l.b16 %v124
    %v324 = vunpack.c.h.b16 %v124
    %v325 = vunpack.c.l.b16 %v125
    %v326 = vunpack.c.h.b16 %v125
    %v327 = vunpack.c.l.b16 %v126
    %v328 = vunpack.c.h.b16 %v126
    %v329 = vunpack.c.l.b16 %v127
    %v330 = vunpack.c.h.b16 %v127
    %v331 = vunpack.c.l.b16 %v128
    %v332 = vunpack.c.h.b16 %v128
    %v333 = vunpack.c.l.b16 %v129
    %v334 = vunpack.c.h.b16 %v129
    %v335 = vunpack.c.l.b16 %v130
    %v336 = vunpack.c.h.b16 %v130
    %v337 = vunpack.c.l.b16 %v131
    %v338 = vunpack.c.h.b16 %v131
    %v339 = vunpack.c.l.b16 %v132
    %v340 = vunpack.c.h.b16 %v132
    %v341 = vunpack.c.l.b16 %v133
    %v342 = vunpack.c.h.b16 %v133
    %v343 = vunpack.c.l.b16 %v134
    %v344 = vunpack.c.h.b16 %v134
    %v345 = vunpack.c.l.b16 %v135
    %v346 = vunpack.c.h.b16 %v135
    %v347 = vunpack.c.l.b16 %v136
    %v348 = vunpack.c.h.b16 %v136
    %v349 = vunpack.c.l.b16 %v137
    %v350 = vunpack.c.h.b16 %v137
    %v351 = vunpack.c.l.b16 %v138
    %v352 = vunpack.c.h.b16 %v138
    %v353 = vunpack.c.l.b16 %v139
    %v354 = vunpack.c.h.b16 %v139
    %v355 = vunpack.c.l.b16 %v140
    %v356 = vunpack.c.h.b16 %v140
    %v357 = vunpack.c.l.b16 %v141
    %v358 = vunpack.c.h.b16 %v141
    %v359 = vunpack.c.l.b16 %v142
    %v360 = vunpack.c.h.b16 %v142
    %v361 = vunpack.c.l.b16 %v143
    %v362 = vunpack.c.h.b16 %v143
    %v363 = vunpack.c.l.b16 %v144
    %v364 = vunpack.c.h.b16 %v144
    %v365 = vunpack.c.l.b16 %v145
    %v366 = vunpack.c.h.b16 %v145
    %v367 = vpack.c.b16 %v243, %v239
    %v368 = vpack.c.b16 %v244, %v240
    %v369 = vpack.c.b16 %v245, %v241
    %v370 = vpack.c.b16 %v246, %v242
    %v371 = vpack.c.b16 %v251, %v247
    %v372 = vpack.c.b16 %v252, %v248
    %v373 = vpack.c.b16 %v253, %v249
    %v374 = vpack.c.b16 %v254, %v250
    %v375 = vpack.c.b16 %v259, %v255
    %v376 = vpack.c.b16 %v260, %v256
    %v377 = vpack.c.b16 %v261, %v257
    %v378 = vpack.c.b16 %v262, %v258
    %v379 = vpack.c.b16 %v267, %v263
    %v380 = vpack.c.b16 %v268, %v264
    %v381 = vpack.c.b16 %v269, %v265
    %v382 = vpack.c.b16 %v270, %v266
    %v383 = vpack.c.b16 %v275, %v271
    %v384 = vpack.c.b16 %v276, %v272
    %v385 = vpack.c.b16 %v277, %v273
    %v386 = vpack.c.b16 %v278, %v274
    %v387 = vpack.c.b16 %v283, %v279
    %v388 = vpack.c.b16 %v284, %v280
    %v389 = vpack.c.b16 %v285, %v281
    %v390 = vpack.c.b16 %v286, %v282
    %v391 = vpack.c.b16 %v291, %v287
    %v392 = vpack.c.b16 %v292, %v288
    %v393 = vpack.c.b16 %v293, %v289
    %v394 = vpack.c.b16 %v294, %v290
    %v395 = vpack.c.b16 %v299, %v295
    %v396 = vpack.c.b16 %v300, %v296
    %v397 = vpack.c.b16 %v301, %v297
    %v398 = vpack.c.b16 %v302, %v298
    %v399 = vpack.c.b16 %v307, %v303
    %v400 = vpack.c.b16 %v308, %v304
    %v401 = vpack.c.b16 %v309, %v305
    %v402 = vpack.c.b16 %v310, %v306
    %v403 = vpack.c.b16 %v315, %v311
    %v404 = vpack.c.b16 %v316, %v312
    %v405 = vpack.c.b16 %v317, %v313
    %v406 = vpack.c.b16 %v318, %v314
    %v407 = vpack.c.b16 %v323, %v319
    %v408 = vpack.c.b16 %v324, %v320
    %v409 = vpack.c.b16 %v325, %v321
    %v410 = vpack.c.b16 %v326, %v322
    %v411 = vpack.c.b16 %v331, %v327
    %v412 = vpack.c.b16 %v332, %v328
    %v413 = vpack.c.b16 %v333, %v329
    %v414 = vpack.c.b16 %v334, %v330
    %v415 = vpack.c.b16 %v339, %v335
    %v416 = vpack.c.b16 %v340, %v336
    %v417 = vpack.c.b16 %v341, %v337
    %v418 = vpack.c.b16 %v342, %v338
    %v419 = vpack.c.b16 %v347, %v343
    %v420 = vpack.c.b16 %v348, %v344
    %v421 = vpack.c.b16 %v349, %v345
    %v422 = vpack.c.b16 %v350, %v346
    %v423 = vpack.c.b16 %v355, %v351
    %v424 = vpack.c.b16 %v356, %v352
    %v425 = vpack.c.b16 %v357, %v353
    %v426 = vpack.c.b16 %v358, %v354
    %v427 = vpack.c.b16 %v363, %v359
    %v428 = vpack.c.b16 %v364, %v360
    %v429 = vpack.c.b16 %v365, %v361
    %v430 = vpack.c.b16 %v366, %v362
    %495 = vmatprep.subr.bf16.mxu0 %v368
    %496 = vmatpush1.bf16.msra.mxu0 %v367
    %497 = vmatprep.subr.bf16.mxu0 %v372
    %498 = vmatpush1.bf16.msra.mxu0 %v371
    %499 = vmatprep.subr.bf16.mxu0 %v376
    %500 = vmatpush1.bf16.msra.mxu0 %v375
    %501 = vmatprep.subr.bf16.mxu0 %v380
    %502 = vmatpush1.bf16.msra.mxu0 %v379
    %503 = vmatprep.subr.bf16.mxu0 %v384
    %504 = vmatpush1.bf16.msra.mxu0 %v383
    %505 = vmatprep.subr.bf16.mxu0 %v388
    %506 = vmatpush1.bf16.msra.mxu0 %v387
    %507 = vmatprep.subr.bf16.mxu0 %v392
    %508 = vmatpush1.bf16.msra.mxu0 %v391
    %509 = vmatprep.subr.bf16.mxu0 %v396
    %510 = vmatpush1.bf16.msra.mxu0 %v395
    %511 = vmatprep.subr.bf16.mxu0 %v400
    %512 = vmatpush1.bf16.msra.mxu0 %v399
    %513 = vmatprep.subr.bf16.mxu0 %v404
    %514 = vmatpush1.bf16.msra.mxu0 %v403
    %515 = vmatprep.subr.bf16.mxu0 %v408
    %516 = vmatpush1.bf16.msra.mxu0 %v407
    %517 = vmatprep.subr.bf16.mxu0 %v412
    %518 = vmatpush1.bf16.msra.mxu0 %v411
    %519 = vmatprep.subr.bf16.mxu0 %v416
    %520 = vmatpush1.bf16.msra.mxu0 %v415
    %521 = vmatprep.subr.bf16.mxu0 %v420
    %522 = vmatpush1.bf16.msra.mxu0 %v419
    %523 = vmatprep.subr.bf16.mxu0 %v424
    %524 = vmatpush1.bf16.msra.mxu0 %v423
    %525 = vmatprep.subr.bf16.mxu0 %v428
    %526 = vmatpush1.bf16.msra.mxu0 %v427
    %527 = vmatprep.mubr.bf16.mxu0 %v172
    %528 = vmatmul.mubr.bf16.gmra.mrb[0].mxu0 %v171
    %v529 = vpop.f32.mrb[0].mxu0
    %v530 = vadd.f32 %v151, %v529
    %v531 = vpop.f32.mrb[0].mxu0
    %v532 = vadd.f32 %v155, %v531
    %v533 = vpop.f32.mrb[0].mxu0
    %v534 = vpop.f32.mrb[0].mxu0
    %535 = vdwg.mxu0
    %536 = vmatprep.subr.bf16.mxu0 %v370
    %537 = vmatpush1.bf16.msra.mxu0 %v369
    %538 = vmatprep.subr.bf16.mxu0 %v374
    %539 = vmatpush1.bf16.msra.mxu0 %v373
    %540 = vmatprep.subr.bf16.mxu0 %v378
    %541 = vmatpush1.bf16.msra.mxu0 %v377
    %542 = vmatprep.subr.bf16.mxu0 %v382
    %543 = vmatpush1.bf16.msra.mxu0 %v381
    %544 = vmatprep.subr.bf16.mxu0 %v386
    %545 = vmatpush1.bf16.msra.mxu0 %v385
    %546 = vmatprep.subr.bf16.mxu0 %v390
    %547 = vmatpush1.bf16.msra.mxu0 %v389
    %548 = vmatprep.subr.bf16.mxu0 %v394
    %549 = vmatpush1.bf16.msra.mxu0 %v393
    %550 = vmatprep.subr.bf16.mxu0 %v398
    %551 = vmatpush1.bf16.msra.mxu0 %v397
    %552 = vmatprep.subr.bf16.mxu0 %v402
    %553 = vmatpush1.bf16.msra.mxu0 %v401
    %554 = vmatprep.subr.bf16.mxu0 %v406
    %555 = vmatpush1.bf16.msra.mxu0 %v405
    %556 = vmatprep.subr.bf16.mxu0 %v410
    %557 = vmatpush1.bf16.msra.mxu0 %v409
    %558 = vmatprep.subr.bf16.mxu0 %v414
    %559 = vmatpush1.bf16.msra.mxu0 %v413
    %560 = vmatprep.subr.bf16.mxu0 %v418
    %561 = vmatpush1.bf16.msra.mxu0 %v417
    %562 = vmatprep.subr.bf16.mxu0 %v422
    %563 = vmatpush1.bf16.msra.mxu0 %v421
    %564 = vmatprep.subr.bf16.mxu0 %v426
    %565 = vmatpush1.bf16.msra.mxu0 %v425
    %566 = vmatprep.subr.bf16.mxu0 %v430
    %567 = vmatpush1.bf16.msra.mxu0 %v429
    %568 = vmatprep.mubr.bf16.mxu0 %v172
    %569 = vmatmul.mubr.bf16.gmra.mrb[0].mxu0 %v171
    %v570 = vpop.f32.mrb[0].mxu0
    %v571 = vadd.f32 %v159, %v570
    %v572 = vpop.f32.mrb[0].mxu0
    %v573 = vadd.f32 %v163, %v572
    %v574 = vpop.f32.mrb[0].mxu0
    %v575 = vpop.f32.mrb[0].mxu0
    %576 = vdwg.mxu0
    %v577 = vmax.f32 %v530, 0.0
    %v578 = vmax.f32 %v532, 0.0
    %v579 = vmax.f32 %v571, 0.0
    %v580 = vmax.f32 %v573, 0.0
    %v581 = vpack.c.bf16 %v577, %v577
    %v582 = vpack.c.bf16 %v578, %v578
    %v583 = vpack.c.bf16 %v579, %v579
    %v584 = vpack.c.bf16 %v580, %v580
    %v585 = vld [vmem:[#allocation7] sm:$0xff]
    %v586 = vld [vmem:[#allocation7 + $0x8] sm:$0xff]
    %v587 = vld [vmem:[#allocation7 + $0x10] sm:$0xff]
    %v588 = vld [vmem:[#allocation7 + $0x18] sm:$0xff]
    %v589 = vld [vmem:[#allocation7 + $0x20] sm:$0xff]
    %v590 = vld [vmem:[#allocation7 + $0x28] sm:$0xff]
    %v591 = vld [vmem:[#allocation7 + $0x30] sm:$0xff]
    %v592 = vld [vmem:[#allocation7 + $0x38] sm:$0xff]
    %v593 = vld [vmem:[#allocation7 + $0x40] sm:$0xff]
    %v594 = vld [vmem:[#allocation7 + $0x48] sm:$0xff]
    %v595 = vld [vmem:[#allocation7 + $0x50] sm:$0xff]
    %v596 = vld [vmem:[#allocation7 + $0x58] sm:$0xff]
    %v597 = vld [vmem:[#allocation7 + $0x60] sm:$0xff]
    %v598 = vld [vmem:[#allocation7 + $0x68] sm:$0xff]
    %v599 = vld [vmem:[#allocation7 + $0x70] sm:$0xff]
    %v600 = vld [vmem:[#allocation7 + $0x78] sm:$0xff]
    %v601 = vld [vmem:[#allocation7 + $0x80] sm:$0xff]
    %v602 = vld [vmem:[#allocation7 + $0x88] sm:$0xff]
    %v603 = vld [vmem:[#allocation7 + $0x90] sm:$0xff]
    %v604 = vld [vmem:[#allocation7 + $0x98] sm:$0xff]
    %v605 = vld [vmem:[#allocation7 + $0xa0] sm:$0xff]
    %v606 = vld [vmem:[#allocation7 + $0xa8] sm:$0xff]
    %v607 = vld [vmem:[#allocation7 + $0xb0] sm:$0xff]
    %v608 = vld [vmem:[#allocation7 + $0xb8] sm:$0xff]
    %v609 = vld [vmem:[#allocation7 + $0xc0] sm:$0xff]
    %v610 = vld [vmem:[#allocation7 + $0xc8] sm:$0xff]
    %v611 = vld [vmem:[#allocation7 + $0xd0] sm:$0xff]
    %v612 = vld [vmem:[#allocation7 + $0xd8] sm:$0xff]
    %v613 = vld [vmem:[#allocation7 + $0xe0] sm:$0xff]
    %v614 = vld [vmem:[#allocation7 + $0xe8] sm:$0xff]
    %v615 = vld [vmem:[#allocation7 + $0xf0] sm:$0xff]
    %v616 = vld [vmem:[#allocation7 + $0xf8] sm:$0xff]
    %v617 = vld [vmem:[#allocation7 + $0x100] sm:$0xff]
    %v618 = vld [vmem:[#allocation7 + $0x108] sm:$0xff]
    %v619 = vld [vmem:[#allocation7 + $0x110] sm:$0xff]
    %v620 = vld [vmem:[#allocation7 + $0x118] sm:$0xff]
    %v621 = vld [vmem:[#allocation7 + $0x120] sm:$0xff]
    %v622 = vld [vmem:[#allocation7 + $0x128] sm:$0xff]
    %v623 = vld [vmem:[#allocation7 + $0x130] sm:$0xff]
    %v624 = vld [vmem:[#allocation7 + $0x138] sm:$0xff]
    %v625 = vld [vmem:[#allocation7 + $0x140] sm:$0xff]
    %v626 = vld [vmem:[#allocation7 + $0x148] sm:$0xff]
    %v627 = vld [vmem:[#allocation7 + $0x150] sm:$0xff]
    %v628 = vld [vmem:[#allocation7 + $0x158] sm:$0xff]
    %v629 = vld [vmem:[#allocation7 + $0x160] sm:$0xff]
    %v630 = vld [vmem:[#allocation7 + $0x168] sm:$0xff]
    %v631 = vld [vmem:[#allocation7 + $0x170] sm:$0xff]
    %v632 = vld [vmem:[#allocation7 + $0x178] sm:$0xff]
    %v633 = vld [vmem:[#allocation7 + $0x180] sm:$0xff]
    %v634 = vld [vmem:[#allocation7 + $0x188] sm:$0xff]
    %v635 = vld [vmem:[#allocation7 + $0x190] sm:$0xff]
    %v636 = vld [vmem:[#allocation7 + $0x198] sm:$0xff]
    %v637 = vld [vmem:[#allocation7 + $0x1a0] sm:$0xff]
    %v638 = vld [vmem:[#allocation7 + $0x1a8] sm:$0xff]
    %v639 = vld [vmem:[#allocation7 + $0x1b0] sm:$0xff]
    %v640 = vld [vmem:[#allocation7 + $0x1b8] sm:$0xff]
    %v641 = vld [vmem:[#allocation7 + $0x1c0] sm:$0xff]
    %v642 = vld [vmem:[#allocation7 + $0x1c8] sm:$0xff]
    %v643 = vld [vmem:[#allocation7 + $0x1d0] sm:$0xff]
    %v644 = vld [vmem:[#allocation7 + $0x1d8] sm:$0xff]
    %v645 = vld [vmem:[#allocation7 + $0x1e0] sm:$0xff]
    %v646 = vld [vmem:[#allocation7 + $0x1e8] sm:$0xff]
    %v647 = vld [vmem:[#allocation7 + $0x1f0] sm:$0xff]
    %v648 = vld [vmem:[#allocation7 + $0x1f8] sm:$0xff]
    %v649 = vld [vmem:[#allocation7 + $0x200] sm:$0xff]
    %v650 = vld [vmem:[#allocation7 + $0x208] sm:$0xff]
    %v651 = vld [vmem:[#allocation7 + $0x210] sm:$0xff]
    %v652 = vld [vmem:[#allocation7 + $0x218] sm:$0xff]
    %v653 = vld [vmem:[#allocation7 + $0x220] sm:$0xff]
    %v654 = vld [vmem:[#allocation7 + $0x228] sm:$0xff]
    %v655 = vld [vmem:[#allocation7 + $0x230] sm:$0xff]
    %v656 = vld [vmem:[#allocation7 + $0x238] sm:$0xff]
    %v657 = vld [vmem:[#allocation7 + $0x240] sm:$0xff]
    %v658 = vld [vmem:[#allocation7 + $0x248] sm:$0xff]
    %v659 = vld [vmem:[#allocation7 + $0x250] sm:$0xff]
    %v660 = vld [vmem:[#allocation7 + $0x258] sm:$0xff]
    %v661 = vld [vmem:[#allocation7 + $0x260] sm:$0xff]
    %v662 = vld [vmem:[#allocation7 + $0x268] sm:$0xff]
    %v663 = vld [vmem:[#allocation7 + $0x270] sm:$0xff]
    %v664 = vld [vmem:[#allocation7 + $0x278] sm:$0xff]
    %v665 = vld [vmem:[#allocation7 + $0x280] sm:$0xff]
    %v666 = vld [vmem:[#allocation7 + $0x288] sm:$0xff]
    %v667 = vld [vmem:[#allocation7 + $0x290] sm:$0xff]
    %v668 = vld [vmem:[#allocation7 + $0x298] sm:$0xff]
    %v669 = vld [vmem:[#allocation7 + $0x2a0] sm:$0xff]
    %v670 = vld [vmem:[#allocation7 + $0x2a8] sm:$0xff]
    %v671 = vld [vmem:[#allocation7 + $0x2b0] sm:$0xff]
    %v672 = vld [vmem:[#allocation7 + $0x2b8] sm:$0xff]
    %v673 = vld [vmem:[#allocation7 + $0x2c0] sm:$0xff]
    %v674 = vld [vmem:[#allocation7 + $0x2c8] sm:$0xff]
    %v675 = vld [vmem:[#allocation7 + $0x2d0] sm:$0xff]
    %v676 = vld [vmem:[#allocation7 + $0x2d8] sm:$0xff]
    %v677 = vld [vmem:[#allocation7 + $0x2e0] sm:$0xff]
    %v678 = vld [vmem:[#allocation7 + $0x2e8] sm:$0xff]
    %v679 = vld [vmem:[#allocation7 + $0x2f0] sm:$0xff]
    %v680 = vld [vmem:[#allocation7 + $0x2f8] sm:$0xff]
    %v681 = vld [vmem:[#allocation7 + $0x300] sm:$0xff]
    %v682 = vld [vmem:[#allocation7 + $0x308] sm:$0xff]
    %v683 = vld [vmem:[#allocation7 + $0x310] sm:$0xff]
    %v684 = vld [vmem:[#allocation7 + $0x318] sm:$0xff]
    %v685 = vld [vmem:[#allocation7 + $0x320] sm:$0xff]
    %v686 = vld [vmem:[#allocation7 + $0x328] sm:$0xff]
    %v687 = vld [vmem:[#allocation7 + $0x330] sm:$0xff]
    %v688 = vld [vmem:[#allocation7 + $0x338] sm:$0xff]
    %v689 = vld [vmem:[#allocation7 + $0x340] sm:$0xff]
    %v690 = vld [vmem:[#allocation7 + $0x348] sm:$0xff]
    %v691 = vld [vmem:[#allocation7 + $0x350] sm:$0xff]
    %v692 = vld [vmem:[#allocation7 + $0x358] sm:$0xff]
    %v693 = vld [vmem:[#allocation7 + $0x360] sm:$0xff]
    %v694 = vld [vmem:[#allocation7 + $0x368] sm:$0xff]
    %v695 = vld [vmem:[#allocation7 + $0x370] sm:$0xff]
    %v696 = vld [vmem:[#allocation7 + $0x378] sm:$0xff]
    %v697 = vld [vmem:[#allocation7 + $0x380] sm:$0xff]
    %v698 = vld [vmem:[#allocation7 + $0x388] sm:$0xff]
    %v699 = vld [vmem:[#allocation7 + $0x390] sm:$0xff]
    %v700 = vld [vmem:[#allocation7 + $0x398] sm:$0xff]
    %v701 = vld [vmem:[#allocation7 + $0x3a0] sm:$0xff]
    %v702 = vld [vmem:[#allocation7 + $0x3a8] sm:$0xff]
    %v703 = vld [vmem:[#allocation7 + $0x3b0] sm:$0xff]
    %v704 = vld [vmem:[#allocation7 + $0x3b8] sm:$0xff]
    %v705 = vld [vmem:[#allocation7 + $0x3c0] sm:$0xff]
    %v706 = vld [vmem:[#allocation7 + $0x3c8] sm:$0xff]
    %v707 = vld [vmem:[#allocation7 + $0x3d0] sm:$0xff]
    %v708 = vld [vmem:[#allocation7 + $0x3d8] sm:$0xff]
    %v709 = vld [vmem:[#allocation7 + $0x3e0] sm:$0xff]
    %v710 = vld [vmem:[#allocation7 + $0x3e8] sm:$0xff]
    %v711 = vld [vmem:[#allocation7 + $0x3f0] sm:$0xff]
    %v712 = vld [vmem:[#allocation7 + $0x3f8] sm:$0xff]
    %v713 = vld [vmem:[%s4] sm:$0xf]
    %v715 = vlaneseq
    %v716 = vshrl.u32 %v715, 7
    %v717 = vsub.s32 0, %v716
    %v718 = vrot.slane %v713, %v717
    %v719 = vlaneseq
    %v720 = vshrl.u32 %v719, 7
    %v721 = vsub.s32 1, %v720
    %v722 = vrot.slane %v713, %v721
    %v723 = vlaneseq
    %v724 = vshrl.u32 %v723, 7
    %v725 = vsub.s32 2, %v724
    %v726 = vrot.slane %v713, %v725
    %v727 = vlaneseq
    %v728 = vshrl.u32 %v727, 7
    %v729 = vsub.s32 3, %v728
    %v730 = vrot.slane %v713, %v729
    %v863 = vunpack.c.l.b16 %v585
    %v864 = vunpack.c.h.b16 %v585
    %v865 = vunpack.c.l.b16 %v586
    %v866 = vunpack.c.h.b16 %v586
    %v867 = vunpack.c.l.b16 %v587
    %v868 = vunpack.c.h.b16 %v587
    %v869 = vunpack.c.l.b16 %v588
    %v870 = vunpack.c.h.b16 %v588
    %v871 = vunpack.c.l.b16 %v589
    %v872 = vunpack.c.h.b16 %v589
    %v873 = vunpack.c.l.b16 %v590
    %v874 = vunpack.c.h.b16 %v590
    %v875 = vunpack.c.l.b16 %v591
    %v876 = vunpack.c.h.b16 %v591
    %v877 = vunpack.c.l.b16 %v592
    %v878 = vunpack.c.h.b16 %v592
    %v879 = vunpack.c.l.b16 %v593
    %v880 = vunpack.c.h.b16 %v593
    %v881 = vunpack.c.l.b16 %v594
    %v882 = vunpack.c.h.b16 %v594
    %v883 = vunpack.c.l.b16 %v595
    %v884 = vunpack.c.h.b16 %v595
    %v885 = vunpack.c.l.b16 %v596
    %v886 = vunpack.c.h.b16 %v596
    %v887 = vunpack.c.l.b16 %v597
    %v888 = vunpack.c.h.b16 %v597
    %v889 = vunpack.c.l.b16 %v598
    %v890 = vunpack.c.h.b16 %v598
    %v891 = vunpack.c.l.b16 %v599
    %v892 = vunpack.c.h.b16 %v599
    %v893 = vunpack.c.l.b16 %v600
    %v894 = vunpack.c.h.b16 %v600
    %v895 = vunpack.c.l.b16 %v601
    %v896 = vunpack.c.h.b16 %v601
    %v897 = vunpack.c.l.b16 %v602
    %v898 = vunpack.c.h.b16 %v602
    %v899 = vunpack.c.l.b16 %v603
    %v900 = vunpack.c.h.b16 %v603
    %v901 = vunpack.c.l.b16 %v604
    %v902 = vunpack.c.h.b16 %v604
    %v903 = vunpack.c.l.b16 %v605
    %v904 = vunpack.c.h.b16 %v605
    %v905 = vunpack.c.l.b16 %v606
    %v906 = vunpack.c.h.b16 %v606
    %v907 = vunpack.c.l.b16 %v607
    %v908 = vunpack.c.h.b16 %v607
    %v909 = vunpack.c.l.b16 %v608
    %v910 = vunpack.c.h.b16 %v608
    %v911 = vunpack.c.l.b16 %v609
    %v912 = vunpack.c.h.b16 %v609
    %v913 = vunpack.c.l.b16 %v610
    %v914 = vunpack.c.h.b16 %v610
    %v915 = vunpack.c.l.b16 %v611
    %v916 = vunpack.c.h.b16 %v611
    %v917 = vunpack.c.l.b16 %v612
    %v918 = vunpack.c.h.b16 %v612
    %v919 = vunpack.c.l.b16 %v613
    %v920 = vunpack.c.h.b16 %v613
    %v921 = vunpack.c.l.b16 %v614
    %v922 = vunpack.c.h.b16 %v614
    %v923 = vunpack.c.l.b16 %v615
    %v924 = vunpack.c.h.b16 %v615
    %v925 = vunpack.c.l.b16 %v616
    %v926 = vunpack.c.h.b16 %v616
    %v927 = vunpack.c.l.b16 %v617
    %v928 = vunpack.c.h.b16 %v617
    %v929 = vunpack.c.l.b16 %v618
    %v930 = vunpack.c.h.b16 %v618
    %v931 = vunpack.c.l.b16 %v619
    %v932 = vunpack.c.h.b16 %v619
    %v933 = vunpack.c.l.b16 %v620
    %v934 = vunpack.c.h.b16 %v620
    %v935 = vunpack.c.l.b16 %v621
    %v936 = vunpack.c.h.b16 %v621
    %v937 = vunpack.c.l.b16 %v622
    %v938 = vunpack.c.h.b16 %v622
    %v939 = vunpack.c.l.b16 %v623
    %v940 = vunpack.c.h.b16 %v623
    %v941 = vunpack.c.l.b16 %v624
    %v942 = vunpack.c.h.b16 %v624
    %v943 = vunpack.c.l.b16 %v625
    %v944 = vunpack.c.h.b16 %v625
    %v945 = vunpack.c.l.b16 %v626
    %v946 = vunpack.c.h.b16 %v626
    %v947 = vunpack.c.l.b16 %v627
    %v948 = vunpack.c.h.b16 %v627
    %v949 = vunpack.c.l.b16 %v628
    %v950 = vunpack.c.h.b16 %v628
    %v951 = vunpack.c.l.b16 %v629
    %v952 = vunpack.c.h.b16 %v629
    %v953 = vunpack.c.l.b16 %v630
    %v954 = vunpack.c.h.b16 %v630
    %v955 = vunpack.c.l.b16 %v631
    %v956 = vunpack.c.h.b16 %v631
    %v957 = vunpack.c.l.b16 %v632
    %v958 = vunpack.c.h.b16 %v632
    %v959 = vunpack.c.l.b16 %v633
    %v960 = vunpack.c.h.b16 %v633
    %v961 = vunpack.c.l.b16 %v634
    %v962 = vunpack.c.h.b16 %v634
    %v963 = vunpack.c.l.b16 %v635
    %v964 = vunpack.c.h.b16 %v635
    %v965 = vunpack.c.l.b16 %v636
    %v966 = vunpack.c.h.b16 %v636
    %v967 = vunpack.c.l.b16 %v637
    %v968 = vunpack.c.h.b16 %v637
    %v969 = vunpack.c.l.b16 %v638
    %v970 = vunpack.c.h.b16 %v638
    %v971 = vunpack.c.l.b16 %v639
    %v972 = vunpack.c.h.b16 %v639
    %v973 = vunpack.c.l.b16 %v640
    %v974 = vunpack.c.h.b16 %v640
    %v975 = vunpack.c.l.b16 %v641
    %v976 = vunpack.c.h.b16 %v641
    %v977 = vunpack.c.l.b16 %v642
    %v978 = vunpack.c.h.b16 %v642
    %v979 = vunpack.c.l.b16 %v643
    %v980 = vunpack.c.h.b16 %v643
    %v981 = vunpack.c.l.b16 %v644
    %v982 = vunpack.c.h.b16 %v644
    %v983 = vunpack.c.l.b16 %v645
    %v984 = vunpack.c.h.b16 %v645
    %v985 = vunpack.c.l.b16 %v646
    %v986 = vunpack.c.h.b16 %v646
    %v987 = vunpack.c.l.b16 %v647
    %v988 = vunpack.c.h.b16 %v647
    %v989 = vunpack.c.l.b16 %v648
    %v990 = vunpack.c.h.b16 %v648
    %v991 = vunpack.c.l.b16 %v649
    %v992 = vunpack.c.h.b16 %v649
    %v993 = vunpack.c.l.b16 %v650
    %v994 = vunpack.c.h.b16 %v650
    %v995 = vunpack.c.l.b16 %v651
    %v996 = vunpack.c.h.b16 %v651
    %v997 = vunpack.c.l.b16 %v652
    %v998 = vunpack.c.h.b16 %v652
    %v999 = vunpack.c.l.b16 %v653
    %v1000 = vunpack.c.h.b16 %v653
    %v1001 = vunpack.c.l.b16 %v654
    %v1002 = vunpack.c.h.b16 %v654
    %v1003 = vunpack.c.l.b16 %v655
    %v1004 = vunpack.c.h.b16 %v655
    %v1005 = vunpack.c.l.b16 %v656
    %v1006 = vunpack.c.h.b16 %v656
    %v1007 = vunpack.c.l.b16 %v657
    %v1008 = vunpack.c.h.b16 %v657
    %v1009 = vunpack.c.l.b16 %v658
    %v1010 = vunpack.c.h.b16 %v658
    %v1011 = vunpack.c.l.b16 %v659
    %v1012 = vunpack.c.h.b16 %v659
    %v1013 = vunpack.c.l.b16 %v660
    %v1014 = vunpack.c.h.b16 %v660
    %v1015 = vunpack.c.l.b16 %v661
    %v1016 = vunpack.c.h.b16 %v661
    %v1017 = vunpack.c.l.b16 %v662
    %v1018 = vunpack.c.h.b16 %v662
    %v1019 = vunpack.c.l.b16 %v663
    %v1020 = vunpack.c.h.b16 %v663
    %v1021 = vunpack.c.l.b16 %v664
    %v1022 = vunpack.c.h.b16 %v664
    %v1023 = vunpack.c.l.b16 %v665
    %v1024 = vunpack.c.h.b16 %v665
    %v1025 = vunpack.c.l.b16 %v666
    %v1026 = vunpack.c.h.b16 %v666
    %v1027 = vunpack.c.l.b16 %v667
    %v1028 = vunpack.c.h.b16 %v667
    %v1029 = vunpack.c.l.b16 %v668
    %v1030 = vunpack.c.h.b16 %v668
    %v1031 = vunpack.c.l.b16 %v669
    %v1032 = vunpack.c.h.b16 %v669
    %v1033 = vunpack.c.l.b16 %v670
    %v1034 = vunpack.c.h.b16 %v670
    %v1035 = vunpack.c.l.b16 %v671
    %v1036 = vunpack.c.h.b16 %v671
    %v1037 = vunpack.c.l.b16 %v672
    %v1038 = vunpack.c.h.b16 %v672
    %v1039 = vunpack.c.l.b16 %v673
    %v1040 = vunpack.c.h.b16 %v673
    %v1041 = vunpack.c.l.b16 %v674
    %v1042 = vunpack.c.h.b16 %v674
    %v1043 = vunpack.c.l.b16 %v675
    %v1044 = vunpack.c.h.b16 %v675
    %v1045 = vunpack.c.l.b16 %v676
    %v1046 = vunpack.c.h.b16 %v676
    %v1047 = vunpack.c.l.b16 %v677
    %v1048 = vunpack.c.h.b16 %v677
    %v1049 = vunpack.c.l.b16 %v678
    %v1050 = vunpack.c.h.b16 %v678
    %v1051 = vunpack.c.l.b16 %v679
    %v1052 = vunpack.c.h.b16 %v679
    %v1053 = vunpack.c.l.b16 %v680
    %v1054 = vunpack.c.h.b16 %v680
    %v1055 = vunpack.c.l.b16 %v681
    %v1056 = vunpack.c.h.b16 %v681
    %v1057 = vunpack.c.l.b16 %v682
    %v1058 = vunpack.c.h.b16 %v682
    %v1059 = vunpack.c.l.b16 %v683
    %v1060 = vunpack.c.h.b16 %v683
    %v1061 = vunpack.c.l.b16 %v684
    %v1062 = vunpack.c.h.b16 %v684
    %v1063 = vunpack.c.l.b16 %v685
    %v1064 = vunpack.c.h.b16 %v685
    %v1065 = vunpack.c.l.b16 %v686
    %v1066 = vunpack.c.h.b16 %v686
    %v1067 = vunpack.c.l.b16 %v687
    %v1068 = vunpack.c.h.b16 %v687
    %v1069 = vunpack.c.l.b16 %v688
    %v1070 = vunpack.c.h.b16 %v688
    %v1071 = vunpack.c.l.b16 %v689
    %v1072 = vunpack.c.h.b16 %v689
    %v1073 = vunpack.c.l.b16 %v690
    %v1074 = vunpack.c.h.b16 %v690
    %v1075 = vunpack.c.l.b16 %v691
    %v1076 = vunpack.c.h.b16 %v691
    %v1077 = vunpack.c.l.b16 %v692
    %v1078 = vunpack.c.h.b16 %v692
    %v1079 = vunpack.c.l.b16 %v693
    %v1080 = vunpack.c.h.b16 %v693
    %v1081 = vunpack.c.l.b16 %v694
    %v1082 = vunpack.c.h.b16 %v694
    %v1083 = vunpack.c.l.b16 %v695
    %v1084 = vunpack.c.h.b16 %v695
    %v1085 = vunpack.c.l.b16 %v696
    %v1086 = vunpack.c.h.b16 %v696
    %v1087 = vunpack.c.l.b16 %v697
    %v1088 = vunpack.c.h.b16 %v697
    %v1089 = vunpack.c.l.b16 %v698
    %v1090 = vunpack.c.h.b16 %v698
    %v1091 = vunpack.c.l.b16 %v699
    %v1092 = vunpack.c.h.b16 %v699
    %v1093 = vunpack.c.l.b16 %v700
    %v1094 = vunpack.c.h.b16 %v700
    %v1095 = vunpack.c.l.b16 %v701
    %v1096 = vunpack.c.h.b16 %v701
    %v1097 = vunpack.c.l.b16 %v702
    %v1098 = vunpack.c.h.b16 %v702
    %v1099 = vunpack.c.l.b16 %v703
    %v1100 = vunpack.c.h.b16 %v703
    %v1101 = vunpack.c.l.b16 %v704
    %v1102 = vunpack.c.h.b16 %v704
    %v1103 = vunpack.c.l.b16 %v705
    %v1104 = vunpack.c.h.b16 %v705
    %v1105 = vunpack.c.l.b16 %v706
    %v1106 = vunpack.c.h.b16 %v706
    %v1107 = vunpack.c.l.b16 %v707
    %v1108 = vunpack.c.h.b16 %v707
    %v1109 = vunpack.c.l.b16 %v708
    %v1110 = vunpack.c.h.b16 %v708
    %v1111 = vunpack.c.l.b16 %v709
    %v1112 = vunpack.c.h.b16 %v709
    %v1113 = vunpack.c.l.b16 %v710
    %v1114 = vunpack.c.h.b16 %v710
    %v1115 = vunpack.c.l.b16 %v711
    %v1116 = vunpack.c.h.b16 %v711
    %v1117 = vunpack.c.l.b16 %v712
    %v1118 = vunpack.c.h.b16 %v712
    %v1119 = vpack.c.b16 %v867, %v863
    %v1120 = vpack.c.b16 %v868, %v864
    %v1121 = vpack.c.b16 %v869, %v865
    %v1122 = vpack.c.b16 %v870, %v866
    %v1123 = vpack.c.b16 %v875, %v871
    %v1124 = vpack.c.b16 %v876, %v872
    %v1125 = vpack.c.b16 %v877, %v873
    %v1126 = vpack.c.b16 %v878, %v874
    %v1127 = vpack.c.b16 %v883, %v879
    %v1128 = vpack.c.b16 %v884, %v880
    %v1129 = vpack.c.b16 %v885, %v881
    %v1130 = vpack.c.b16 %v886, %v882
    %v1131 = vpack.c.b16 %v891, %v887
    %v1132 = vpack.c.b16 %v892, %v888
    %v1133 = vpack.c.b16 %v893, %v889
    %v1134 = vpack.c.b16 %v894, %v890
    %v1135 = vpack.c.b16 %v899, %v895
    %v1136 = vpack.c.b16 %v900, %v896
    %v1137 = vpack.c.b16 %v901, %v897
    %v1138 = vpack.c.b16 %v902, %v898
    %v1139 = vpack.c.b16 %v907, %v903
    %v1140 = vpack.c.b16 %v908, %v904
    %v1141 = vpack.c.b16 %v909, %v905
    %v1142 = vpack.c.b16 %v910, %v906
    %v1143 = vpack.c.b16 %v915, %v911
    %v1144 = vpack.c.b16 %v916, %v912
    %v1145 = vpack.c.b16 %v917, %v913
    %v1146 = vpack.c.b16 %v918, %v914
    %v1147 = vpack.c.b16 %v923, %v919
    %v1148 = vpack.c.b16 %v924, %v920
    %v1149 = vpack.c.b16 %v925, %v921
    %v1150 = vpack.c.b16 %v926, %v922
    %v1151 = vpack.c.b16 %v931, %v927
    %v1152 = vpack.c.b16 %v932, %v928
    %v1153 = vpack.c.b16 %v933, %v929
    %v1154 = vpack.c.b16 %v934, %v930
    %v1155 = vpack.c.b16 %v939, %v935
    %v1156 = vpack.c.b16 %v940, %v936
    %v1157 = vpack.c.b16 %v941, %v937
    %v1158 = vpack.c.b16 %v942, %v938
    %v1159 = vpack.c.b16 %v947, %v943
    %v1160 = vpack.c.b16 %v948, %v944
    %v1161 = vpack.c.b16 %v949, %v945
    %v1162 = vpack.c.b16 %v950, %v946
    %v1163 = vpack.c.b16 %v955, %v951
    %v1164 = vpack.c.b16 %v956, %v952
    %v1165 = vpack.c.b16 %v957, %v953
    %v1166 = vpack.c.b16 %v958, %v954
    %v1167 = vpack.c.b16 %v963, %v959
    %v1168 = vpack.c.b16 %v964, %v960
    %v1169 = vpack.c.b16 %v965, %v961
    %v1170 = vpack.c.b16 %v966, %v962
    %v1171 = vpack.c.b16 %v971, %v967
    %v1172 = vpack.c.b16 %v972, %v968
    %v1173 = vpack.c.b16 %v973, %v969
    %v1174 = vpack.c.b16 %v974, %v970
    %v1175 = vpack.c.b16 %v979, %v975
    %v1176 = vpack.c.b16 %v980, %v976
    %v1177 = vpack.c.b16 %v981, %v977
    %v1178 = vpack.c.b16 %v982, %v978
    %v1179 = vpack.c.b16 %v987, %v983
    %v1180 = vpack.c.b16 %v988, %v984
    %v1181 = vpack.c.b16 %v989, %v985
    %v1182 = vpack.c.b16 %v990, %v986
    %v1183 = vpack.c.b16 %v995, %v991
    %v1184 = vpack.c.b16 %v996, %v992
    %v1185 = vpack.c.b16 %v997, %v993
    %v1186 = vpack.c.b16 %v998, %v994
    %v1187 = vpack.c.b16 %v1003, %v999
    %v1188 = vpack.c.b16 %v1004, %v1000
    %v1189 = vpack.c.b16 %v1005, %v1001
    %v1190 = vpack.c.b16 %v1006, %v1002
    %v1191 = vpack.c.b16 %v1011, %v1007
    %v1192 = vpack.c.b16 %v1012, %v1008
    %v1193 = vpack.c.b16 %v1013, %v1009
    %v1194 = vpack.c.b16 %v1014, %v1010
    %v1195 = vpack.c.b16 %v1019, %v1015
    %v1196 = vpack.c.b16 %v1020, %v1016
    %v1197 = vpack.c.b16 %v1021, %v1017
    %v1198 = vpack.c.b16 %v1022, %v1018
    %v1199 = vpack.c.b16 %v1027, %v1023
    %v1200 = vpack.c.b16 %v1028, %v1024
    %v1201 = vpack.c.b16 %v1029, %v1025
    %v1202 = vpack.c.b16 %v1030, %v1026
    %v1203 = vpack.c.b16 %v1035, %v1031
    %v1204 = vpack.c.b16 %v1036, %v1032
    %v1205 = vpack.c.b16 %v1037, %v1033
    %v1206 = vpack.c.b16 %v1038, %v1034
    %v1207 = vpack.c.b16 %v1043, %v1039
    %v1208 = vpack.c.b16 %v1044, %v1040
    %v1209 = vpack.c.b16 %v1045, %v1041
    %v1210 = vpack.c.b16 %v1046, %v1042
    %v1211 = vpack.c.b16 %v1051, %v1047
    %v1212 = vpack.c.b16 %v1052, %v1048
    %v1213 = vpack.c.b16 %v1053, %v1049
    %v1214 = vpack.c.b16 %v1054, %v1050
    %v1215 = vpack.c.b16 %v1059, %v1055
    %v1216 = vpack.c.b16 %v1060, %v1056
    %v1217 = vpack.c.b16 %v1061, %v1057
    %v1218 = vpack.c.b16 %v1062, %v1058
    %v1219 = vpack.c.b16 %v1067, %v1063
    %v1220 = vpack.c.b16 %v1068, %v1064
    %v1221 = vpack.c.b16 %v1069, %v1065
    %v1222 = vpack.c.b16 %v1070, %v1066
    %v1223 = vpack.c.b16 %v1075, %v1071
    %v1224 = vpack.c.b16 %v1076, %v1072
    %v1225 = vpack.c.b16 %v1077, %v1073
    %v1226 = vpack.c.b16 %v1078, %v1074
    %v1227 = vpack.c.b16 %v1083, %v1079
    %v1228 = vpack.c.b16 %v1084, %v1080
    %v1229 = vpack.c.b16 %v1085, %v1081
    %v1230 = vpack.c.b16 %v1086, %v1082
    %v1231 = vpack.c.b16 %v1091, %v1087
    %v1232 = vpack.c.b16 %v1092, %v1088
    %v1233 = vpack.c.b16 %v1093, %v1089
    %v1234 = vpack.c.b16 %v1094, %v1090
    %v1235 = vpack.c.b16 %v1099, %v1095
    %v1236 = vpack.c.b16 %v1100, %v1096
    %v1237 = vpack.c.b16 %v1101, %v1097
    %v1238 = vpack.c.b16 %v1102, %v1098
    %v1239 = vpack.c.b16 %v1107, %v1103
    %v1240 = vpack.c.b16 %v1108, %v1104
    %v1241 = vpack.c.b16 %v1109, %v1105
    %v1242 = vpack.c.b16 %v1110, %v1106
    %v1243 = vpack.c.b16 %v1115, %v1111
    %v1244 = vpack.c.b16 %v1116, %v1112
    %v1245 = vpack.c.b16 %v1117, %v1113
    %v1246 = vpack.c.b16 %v1118, %v1114
    %1375 = vmatprep.subr.bf16.mxu0 %v1120
    %1376 = vmatpush1.bf16.msra.mxu0 %v1119
    %1377 = vmatprep.subr.bf16.mxu0 %v1124
    %1378 = vmatpush1.bf16.msra.mxu0 %v1123
    %1379 = vmatprep.subr.bf16.mxu0 %v1128
    %1380 = vmatpush1.bf16.msra.mxu0 %v1127
    %1381 = vmatprep.subr.bf16.mxu0 %v1132
    %1382 = vmatpush1.bf16.msra.mxu0 %v1131
    %1383 = vmatprep.subr.bf16.mxu0 %v1136
    %1384 = vmatpush1.bf16.msra.mxu0 %v1135
    %1385 = vmatprep.subr.bf16.mxu0 %v1140
    %1386 = vmatpush1.bf16.msra.mxu0 %v1139
    %1387 = vmatprep.subr.bf16.mxu0 %v1144
    %1388 = vmatpush1.bf16.msra.mxu0 %v1143
    %1389 = vmatprep.subr.bf16.mxu0 %v1148
    %1390 = vmatpush1.bf16.msra.mxu0 %v1147
    %1391 = vmatprep.subr.bf16.mxu0 %v1152
    %1392 = vmatpush1.bf16.msra.mxu0 %v1151
    %1393 = vmatprep.subr.bf16.mxu0 %v1156
    %1394 = vmatpush1.bf16.msra.mxu0 %v1155
    %1395 = vmatprep.subr.bf16.mxu0 %v1160
    %1396 = vmatpush1.bf16.msra.mxu0 %v1159
    %1397 = vmatprep.subr.bf16.mxu0 %v1164
    %1398 = vmatpush1.bf16.msra.mxu0 %v1163
    %1399 = vmatprep.subr.bf16.mxu0 %v1168
    %1400 = vmatpush1.bf16.msra.mxu0 %v1167
    %1401 = vmatprep.subr.bf16.mxu0 %v1172
    %1402 = vmatpush1.bf16.msra.mxu0 %v1171
    %1403 = vmatprep.subr.bf16.mxu0 %v1176
    %1404 = vmatpush1.bf16.msra.mxu0 %v1175
    %1405 = vmatprep.subr.bf16.mxu0 %v1180
    %1406 = vmatpush1.bf16.msra.mxu0 %v1179
    %1407 = vmatprep.mubr.bf16.mxu0 %v582
    %1408 = vmatmul.mubr.bf16.gmra.mrb[0].mxu0 %v581
    %v1409 = vpop.f32.mrb[0].mxu0
    %v1410 = vadd.f32 %v718, %v1409
    %v1411 = vpop.f32.mrb[0].mxu0
    %v1412 = vadd.f32 %v722, %v1411
    %v1413 = vpop.f32.mrb[0].mxu0
    %v1414 = vpop.f32.mrb[0].mxu0
    %1415 = vdwg.mxu0
    %1416 = vmatprep.subr.bf16.mxu0 %v1184
    %1417 = vmatpush1.bf16.msra.mxu0 %v1183
    %1418 = vmatprep.subr.bf16.mxu0 %v1188
    %1419 = vmatpush1.bf16.msra.mxu0 %v1187
    %1420 = vmatprep.subr.bf16.mxu0 %v1192
    %1421 = vmatpush1.bf16.msra.mxu0 %v1191
    %1422 = vmatprep.subr.bf16.mxu0 %v1196
    %1423 = vmatpush1.bf16.msra.mxu0 %v1195
    %1424 = vmatprep.subr.bf16.mxu0 %v1200
    %1425 = vmatpush1.bf16.msra.mxu0 %v1199
    %1426 = vmatprep.subr.bf16.mxu0 %v1204
    %1427 = vmatpush1.bf16.msra.mxu0 %v1203
    %1428 = vmatprep.subr.bf16.mxu0 %v1208
    %1429 = vmatpush1.bf16.msra.mxu0 %v1207
    %1430 = vmatprep.subr.bf16.mxu0 %v1212
    %1431 = vmatpush1.bf16.msra.mxu0 %v1211
    %1432 = vmatprep.subr.bf16.mxu0 %v1216
    %1433 = vmatpush1.bf16.msra.mxu0 %v1215
    %1434 = vmatprep.subr.bf16.mxu0 %v1220
    %1435 = vmatpush1.bf16.msra.mxu0 %v1219
    %1436 = vmatprep.subr.bf16.mxu0 %v1224
    %1437 = vmatpush1.bf16.msra.mxu0 %v1223
    %1438 = vmatprep.subr.bf16.mxu0 %v1228
    %1439 = vmatpush1.bf16.msra.mxu0 %v1227
    %1440 = vmatprep.subr.bf16.mxu0 %v1232
    %1441 = vmatpush1.bf16.msra.mxu0 %v1231
    %1442 = vmatprep.subr.bf16.mxu0 %v1236
    %1443 = vmatpush1.bf16.msra.mxu0 %v1235
    %1444 = vmatprep.subr.bf16.mxu0 %v1240
    %1445 = vmatpush1.bf16.msra.mxu0 %v1239
    %1446 = vmatprep.subr.bf16.mxu0 %v1244
    %1447 = vmatpush1.bf16.msra.mxu0 %v1243
    %1448 = vmatprep.mubr.bf16.mxu0 %v584
    %1449 = vmatmul.mubr.bf16.gmra.mrb[0].mxu0 %v583
    %v1450 = vpop.f32.mrb[0].mxu0
    %v1451 = vadd.f32 %v1410, %v1450
    %v1452 = vpop.f32.mrb[0].mxu0
    %v1453 = vadd.f32 %v1412, %v1452
    %v1454 = vpop.f32.mrb[0].mxu0
    %v1455 = vpop.f32.mrb[0].mxu0
    %1456 = vdwg.mxu0
    %1457 = vmatprep.subr.bf16.mxu0 %v1122
    %1458 = vmatpush1.bf16.msra.mxu0 %v1121
    %1459 = vmatprep.subr.bf16.mxu0 %v1126
    %1460 = vmatpush1.bf16.msra.mxu0 %v1125
    %1461 = vmatprep.subr.bf16.mxu0 %v1130
    %1462 = vmatpush1.bf16.msra.mxu0 %v1129
    %1463 = vmatprep.subr.bf16.mxu0 %v1134
    %1464 = vmatpush1.bf16.msra.mxu0 %v1133
    %1465 = vmatprep.subr.bf16.mxu0 %v1138
    %1466 = vmatpush1.bf16.msra.mxu0 %v1137
    %1467 = vmatprep.subr.bf16.mxu0 %v1142
    %1468 = vmatpush1.bf16.msra.mxu0 %v1141
    %1469 = vmatprep.subr.bf16.mxu0 %v1146
    %1470 = vmatpush1.bf16.msra.mxu0 %v1145
    %1471 = vmatprep.subr.bf16.mxu0 %v1150
    %1472 = vmatpush1.bf16.msra.mxu0 %v1149
    %1473 = vmatprep.subr.bf16.mxu0 %v1154
    %1474 = vmatpush1.bf16.msra.mxu0 %v1153
    %1475 = vmatprep.subr.bf16.mxu0 %v1158
    %1476 = vmatpush1.bf16.msra.mxu0 %v1157
    %1477 = vmatprep.subr.bf16.mxu0 %v1162
    %1478 = vmatpush1.bf16.msra.mxu0 %v1161
    %1479 = vmatprep.subr.bf16.mxu0 %v1166
    %1480 = vmatpush1.bf16.msra.mxu0 %v1165
    %1481 = vmatprep.subr.bf16.mxu0 %v1170
    %1482 = vmatpush1.bf16.msra.mxu0 %v1169
    %1483 = vmatprep.subr.bf16.mxu0 %v1174
    %1484 = vmatpush1.bf16.msra.mxu0 %v1173
    %1485 = vmatprep.subr.bf16.mxu0 %v1178
    %1486 = vmatpush1.bf16.msra.mxu0 %v1177
    %1487 = vmatprep.subr.bf16.mxu0 %v1182
    %1488 = vmatpush1.bf16.msra.mxu0 %v1181
    %1489 = vmatprep.mubr.bf16.mxu0 %v582
    %1490 = vmatmul.mubr.bf16.gmra.mrb[0].mxu0 %v581
    %v1491 = vpop.f32.mrb[0].mxu0
    %v1492 = vadd.f32 %v726, %v1491
    %v1493 = vpop.f32.mrb[0].mxu0
    %v1494 = vadd.f32 %v730, %v1493
    %v1495 = vpop.f32.mrb[0].mxu0
    %v1496 = vpop.f32.mrb[0].mxu0
    %1497 = vdwg.mxu0
    %1498 = vmatprep.subr.bf16.mxu0 %v1186
    %1499 = vmatpush1.bf16.msra.mxu0 %v1185
    %1500 = vmatprep.subr.bf16.mxu0 %v1190
    %1501 = vmatpush1.bf16.msra.mxu0 %v1189
    %1502 = vmatprep.subr.bf16.mxu0 %v1194
    %1503 = vmatpush1.bf16.msra.mxu0 %v1193
    %1504 = vmatprep.subr.bf16.mxu0 %v1198
    %1505 = vmatpush1.bf16.msra.mxu0 %v1197
    %1506 = vmatprep.subr.bf16.mxu0 %v1202
    %1507 = vmatpush1.bf16.msra.mxu0 %v1201
    %1508 = vmatprep.subr.bf16.mxu0 %v1206
    %1509 = vmatpush1.bf16.msra.mxu0 %v1205
    %1510 = vmatprep.subr.bf16.mxu0 %v1210
    %1511 = vmatpush1.bf16.msra.mxu0 %v1209
    %1512 = vmatprep.subr.bf16.mxu0 %v1214
    %1513 = vmatpush1.bf16.msra.mxu0 %v1213
    %1514 = vmatprep.subr.bf16.mxu0 %v1218
    %1515 = vmatpush1.bf16.msra.mxu0 %v1217
    %1516 = vmatprep.subr.bf16.mxu0 %v1222
    %1517 = vmatpush1.bf16.msra.mxu0 %v1221
    %1518 = vmatprep.subr.bf16.mxu0 %v1226
    %1519 = vmatpush1.bf16.msra.mxu0 %v1225
    %1520 = vmatprep.subr.bf16.mxu0 %v1230
    %1521 = vmatpush1.bf16.msra.mxu0 %v1229
    %1522 = vmatprep.subr.bf16.mxu0 %v1234
    %1523 = vmatpush1.bf16.msra.mxu0 %v1233
    %1524 = vmatprep.subr.bf16.mxu0 %v1238
    %1525 = vmatpush1.bf16.msra.mxu0 %v1237
    %1526 = vmatprep.subr.bf16.mxu0 %v1242
    %1527 = vmatpush1.bf16.msra.mxu0 %v1241
    %1528 = vmatprep.subr.bf16.mxu0 %v1246
    %1529 = vmatpush1.bf16.msra.mxu0 %v1245
    %1530 = vmatprep.mubr.bf16.mxu0 %v584
    %1531 = vmatmul.mubr.bf16.gmra.mrb[0].mxu0 %v583
    %v1532 = vpop.f32.mrb[0].mxu0
    %v1533 = vadd.f32 %v1492, %v1532
    %v1534 = vpop.f32.mrb[0].mxu0
    %v1535 = vadd.f32 %v1494, %v1534
    %v1536 = vpop.f32.mrb[0].mxu0
    %v1537 = vpop.f32.mrb[0].mxu0
    %1538 = vdwg.mxu0
    %v1539 = vmax.f32 %v1451, 0.0
    %v1540 = vmax.f32 %v1453, 0.0
    %v1541 = vmax.f32 %v1533, 0.0
    %v1542 = vmax.f32 %v1535, 0.0
    %v1543 = vpack.c.bf16 %v1539, %v1539
    %v1544 = vpack.c.bf16 %v1540, %v1540
    %v1545 = vpack.c.bf16 %v1541, %v1541
    %v1546 = vpack.c.bf16 %v1542, %v1542
    %v1547 = vld [vmem:[#allocation8] sm:$0xf]
    %v1548 = vld [vmem:[#allocation8 + $0x4] sm:$0xf]
    %v1549 = vld [vmem:[#allocation8 + $0x8] sm:$0xf]
    %v1550 = vld [vmem:[#allocation8 + $0xc] sm:$0xf]
    %v1551 = vld [vmem:[#allocation8 + $0x10] sm:$0xf]
    %v1552 = vld [vmem:[#allocation8 + $0x14] sm:$0xf]
    %v1553 = vld [vmem:[#allocation8 + $0x18] sm:$0xf]
    %v1554 = vld [vmem:[#allocation8 + $0x1c] sm:$0xf]
    %v1555 = vld [vmem:[#allocation8 + $0x20] sm:$0xf]
    %v1556 = vld [vmem:[#allocation8 + $0x24] sm:$0xf]
    %v1557 = vld [vmem:[#allocation8 + $0x28] sm:$0xf]
    %v1558 = vld [vmem:[#allocation8 + $0x2c] sm:$0xf]
    %v1559 = vld [vmem:[#allocation8 + $0x30] sm:$0xf]
    %v1560 = vld [vmem:[#allocation8 + $0x34] sm:$0xf]
    %v1561 = vld [vmem:[#allocation8 + $0x38] sm:$0xf]
    %v1562 = vld [vmem:[#allocation8 + $0x3c] sm:$0xf]
    %v1563 = vld [vmem:[#allocation8 + $0x40] sm:$0xf]
    %v1564 = vld [vmem:[#allocation8 + $0x44] sm:$0xf]
    %v1565 = vld [vmem:[#allocation8 + $0x48] sm:$0xf]
    %v1566 = vld [vmem:[#allocation8 + $0x4c] sm:$0xf]
    %v1567 = vld [vmem:[#allocation8 + $0x50] sm:$0xf]
    %v1568 = vld [vmem:[#allocation8 + $0x54] sm:$0xf]
    %v1569 = vld [vmem:[#allocation8 + $0x58] sm:$0xf]
    %v1570 = vld [vmem:[#allocation8 + $0x5c] sm:$0xf]
    %v1571 = vld [vmem:[#allocation8 + $0x60] sm:$0xf]
    %v1572 = vld [vmem:[#allocation8 + $0x64] sm:$0xf]
    %v1573 = vld [vmem:[#allocation8 + $0x68] sm:$0xf]
    %v1574 = vld [vmem:[#allocation8 + $0x6c] sm:$0xf]
    %v1575 = vld [vmem:[#allocation8 + $0x70] sm:$0xf]
    %v1576 = vld [vmem:[#allocation8 + $0x74] sm:$0xf]
    %v1577 = vld [vmem:[#allocation8 + $0x78] sm:$0xf]
    %v1578 = vld [vmem:[#allocation8 + $0x7c] sm:$0xf]
    %v1579 = vld [vmem:[#allocation8 + $0x80] sm:$0xf]
    %v1580 = vld [vmem:[#allocation8 + $0x84] sm:$0xf]
    %v1581 = vld [vmem:[#allocation8 + $0x88] sm:$0xf]
    %v1582 = vld [vmem:[#allocation8 + $0x8c] sm:$0xf]
    %v1583 = vld [vmem:[#allocation8 + $0x90] sm:$0xf]
    %v1584 = vld [vmem:[#allocation8 + $0x94] sm:$0xf]
    %v1585 = vld [vmem:[#allocation8 + $0x98] sm:$0xf]
    %v1586 = vld [vmem:[#allocation8 + $0x9c] sm:$0xf]
    %v1587 = vld [vmem:[#allocation8 + $0xa0] sm:$0xf]
    %v1588 = vld [vmem:[#allocation8 + $0xa4] sm:$0xf]
    %v1589 = vld [vmem:[#allocation8 + $0xa8] sm:$0xf]
    %v1590 = vld [vmem:[#allocation8 + $0xac] sm:$0xf]
    %v1591 = vld [vmem:[#allocation8 + $0xb0] sm:$0xf]
    %v1592 = vld [vmem:[#allocation8 + $0xb4] sm:$0xf]
    %v1593 = vld [vmem:[#allocation8 + $0xb8] sm:$0xf]
    %v1594 = vld [vmem:[#allocation8 + $0xbc] sm:$0xf]
    %v1595 = vld [vmem:[#allocation8 + $0xc0] sm:$0xf]
    %v1596 = vld [vmem:[#allocation8 + $0xc4] sm:$0xf]
    %v1597 = vld [vmem:[#allocation8 + $0xc8] sm:$0xf]
    %v1598 = vld [vmem:[#allocation8 + $0xcc] sm:$0xf]
    %v1599 = vld [vmem:[#allocation8 + $0xd0] sm:$0xf]
    %v1600 = vld [vmem:[#allocation8 + $0xd4] sm:$0xf]
    %v1601 = vld [vmem:[#allocation8 + $0xd8] sm:$0xf]
    %v1602 = vld [vmem:[#allocation8 + $0xdc] sm:$0xf]
    %v1603 = vld [vmem:[#allocation8 + $0xe0] sm:$0xf]
    %v1604 = vld [vmem:[#allocation8 + $0xe4] sm:$0xf]
    %v1605 = vld [vmem:[#allocation8 + $0xe8] sm:$0xf]
    %v1606 = vld [vmem:[#allocation8 + $0xec] sm:$0xf]
    %v1607 = vld [vmem:[#allocation8 + $0xf0] sm:$0xf]
    %v1608 = vld [vmem:[#allocation8 + $0xf4] sm:$0xf]
    %v1609 = vld [vmem:[#allocation8 + $0xf8] sm:$0xf]
    %v1610 = vld [vmem:[#allocation8 + $0xfc] sm:$0xf]
    %v1611 = vld [vmem:[%s6] sm:$0x1]
    %v1613 = vlaneseq
    %v1614 = vshrl.u32 %v1613, 7
    %v1615 = vsub.s32 0, %v1614
    %v1616 = vrot.slane %v1611, %v1615
    %v1682 = vunpack.c.l.b16 %v1547
    %v1683 = vunpack.c.l.b16 %v1548
    %v1684 = vunpack.c.l.b16 %v1549
    %v1685 = vunpack.c.l.b16 %v1550
    %v1686 = vunpack.c.l.b16 %v1551
    %v1687 = vunpack.c.l.b16 %v1552
    %v1688 = vunpack.c.l.b16 %v1553
    %v1689 = vunpack.c.l.b16 %v1554
    %v1690 = vunpack.c.l.b16 %v1555
    %v1691 = vunpack.c.l.b16 %v1556
    %v1692 = vunpack.c.l.b16 %v1557
    %v1693 = vunpack.c.l.b16 %v1558
    %v1694 = vunpack.c.l.b16 %v1559
    %v1695 = vunpack.c.l.b16 %v1560
    %v1696 = vunpack.c.l.b16 %v1561
    %v1697 = vunpack.c.l.b16 %v1562
    %v1698 = vunpack.c.l.b16 %v1563
    %v1699 = vunpack.c.l.b16 %v1564
    %v1700 = vunpack.c.l.b16 %v1565
    %v1701 = vunpack.c.l.b16 %v1566
    %v1702 = vunpack.c.l.b16 %v1567
    %v1703 = vunpack.c.l.b16 %v1568
    %v1704 = vunpack.c.l.b16 %v1569
    %v1705 = vunpack.c.l.b16 %v1570
    %v1706 = vunpack.c.l.b16 %v1571
    %v1707 = vunpack.c.l.b16 %v1572
    %v1708 = vunpack.c.l.b16 %v1573
    %v1709 = vunpack.c.l.b16 %v1574
    %v1710 = vunpack.c.l.b16 %v1575
    %v1711 = vunpack.c.l.b16 %v1576
    %v1712 = vunpack.c.l.b16 %v1577
    %v1713 = vunpack.c.l.b16 %v1578
    %v1714 = vunpack.c.l.b16 %v1579
    %v1715 = vunpack.c.l.b16 %v1580
    %v1716 = vunpack.c.l.b16 %v1581
    %v1717 = vunpack.c.l.b16 %v1582
    %v1718 = vunpack.c.l.b16 %v1583
    %v1719 = vunpack.c.l.b16 %v1584
    %v1720 = vunpack.c.l.b16 %v1585
    %v1721 = vunpack.c.l.b16 %v1586
    %v1722 = vunpack.c.l.b16 %v1587
    %v1723 = vunpack.c.l.b16 %v1588
    %v1724 = vunpack.c.l.b16 %v1589
    %v1725 = vunpack.c.l.b16 %v1590
    %v1726 = vunpack.c.l.b16 %v1591
    %v1727 = vunpack.c.l.b16 %v1592
    %v1728 = vunpack.c.l.b16 %v1593
    %v1729 = vunpack.c.l.b16 %v1594
    %v1730 = vunpack.c.l.b16 %v1595
    %v1731 = vunpack.c.l.b16 %v1596
    %v1732 = vunpack.c.l.b16 %v1597
    %v1733 = vunpack.c.l.b16 %v1598
    %v1734 = vunpack.c.l.b16 %v1599
    %v1735 = vunpack.c.l.b16 %v1600
    %v1736 = vunpack.c.l.b16 %v1601
    %v1737 = vunpack.c.l.b16 %v1602
    %v1738 = vunpack.c.l.b16 %v1603
    %v1739 = vunpack.c.l.b16 %v1604
    %v1740 = vunpack.c.l.b16 %v1605
    %v1741 = vunpack.c.l.b16 %v1606
    %v1742 = vunpack.c.l.b16 %v1607
    %v1743 = vunpack.c.l.b16 %v1608
    %v1744 = vunpack.c.l.b16 %v1609
    %v1745 = vunpack.c.l.b16 %v1610
    %v1746 = vpack.c.b16 %v1683, %v1682
    %v1747 = vpack.c.b16 %v1685, %v1684
    %v1748 = vpack.c.b16 %v1687, %v1686
    %v1749 = vpack.c.b16 %v1689, %v1688
    %v1750 = vpack.c.b16 %v1691, %v1690
    %v1751 = vpack.c.b16 %v1693, %v1692
    %v1752 = vpack.c.b16 %v1695, %v1694
    %v1753 = vpack.c.b16 %v1697, %v1696
    %v1754 = vpack.c.b16 %v1699, %v1698
    %v1755 = vpack.c.b16 %v1701, %v1700
    %v1756 = vpack.c.b16 %v1703, %v1702
    %v1757 = vpack.c.b16 %v1705, %v1704
    %v1758 = vpack.c.b16 %v1707, %v1706
    %v1759 = vpack.c.b16 %v1709, %v1708
    %v1760 = vpack.c.b16 %v1711, %v1710
    %v1761 = vpack.c.b16 %v1713, %v1712
    %v1762 = vpack.c.b16 %v1715, %v1714
    %v1763 = vpack.c.b16 %v1717, %v1716
    %v1764 = vpack.c.b16 %v1719, %v1718
    %v1765 = vpack.c.b16 %v1721, %v1720
    %v1766 = vpack.c.b16 %v1723, %v1722
    %v1767 = vpack.c.b16 %v1725, %v1724
    %v1768 = vpack.c.b16 %v1727, %v1726
    %v1769 = vpack.c.b16 %v1729, %v1728
    %v1770 = vpack.c.b16 %v1731, %v1730
    %v1771 = vpack.c.b16 %v1733, %v1732
    %v1772 = vpack.c.b16 %v1735, %v1734
    %v1773 = vpack.c.b16 %v1737, %v1736
    %v1774 = vpack.c.b16 %v1739, %v1738
    %v1775 = vpack.c.b16 %v1741, %v1740
    %v1776 = vpack.c.b16 %v1743, %v1742
    %v1777 = vpack.c.b16 %v1745, %v1744
    %1810 = vmatprep.subr.bf16.mxu0 0
    %1811 = vmatpush1.bf16.msra.mxu0 %v1746
    %1812 = vmatprep.subr.bf16.mxu0 0
    %1813 = vmatpush1.bf16.msra.mxu0 %v1747
    %1814 = vmatprep.subr.bf16.mxu0 0
    %1815 = vmatpush1.bf16.msra.mxu0 %v1748
    %1816 = vmatprep.subr.bf16.mxu0 0
    %1817 = vmatpush1.bf16.msra.mxu0 %v1749
    %1818 = vmatprep.subr.bf16.mxu0 0
    %1819 = vmatpush1.bf16.msra.mxu0 %v1750
    %1820 = vmatprep.subr.bf16.mxu0 0
    %1821 = vmatpush1.bf16.msra.mxu0 %v1751
    %1822 = vmatprep.subr.bf16.mxu0 0
    %1823 = vmatpush1.bf16.msra.mxu0 %v1752
    %1824 = vmatprep.subr.bf16.mxu0 0
    %1825 = vmatpush1.bf16.msra.mxu0 %v1753
    %1826 = vmatprep.subr.bf16.mxu0 0
    %1827 = vmatpush1.bf16.msra.mxu0 %v1754
    %1828 = vmatprep.subr.bf16.mxu0 0
    %1829 = vmatpush1.bf16.msra.mxu0 %v1755
    %1830 = vmatprep.subr.bf16.mxu0 0
    %1831 = vmatpush1.bf16.msra.mxu0 %v1756
    %1832 = vmatprep.subr.bf16.mxu0 0
    %1833 = vmatpush1.bf16.msra.mxu0 %v1757
    %1834 = vmatprep.subr.bf16.mxu0 0
    %1835 = vmatpush1.bf16.msra.mxu0 %v1758
    %1836 = vmatprep.subr.bf16.mxu0 0
    %1837 = vmatpush1.bf16.msra.mxu0 %v1759
    %1838 = vmatprep.subr.bf16.mxu0 0
    %1839 = vmatpush1.bf16.msra.mxu0 %v1760
    %1840 = vmatprep.subr.bf16.mxu0 0
    %1841 = vmatpush1.bf16.msra.mxu0 %v1761
    %1842 = vmatprep.mubr.bf16.mxu0 %v1544
    %1843 = vmatmul.mubr.bf16.gmra.mrb[0].mxu0 %v1543
    %v1844 = vpop.f32.mrb[0].mxu0
    %v1845 = vadd.f32 %v1616, %v1844
    %v1846 = vpop.f32.mrb[0].mxu0
    %v1847 = vpop.f32.mrb[0].mxu0
    %v1848 = vpop.f32.mrb[0].mxu0
    %1849 = vdwg.mxu0
    %1850 = vmatprep.subr.bf16.mxu0 0
    %1851 = vmatpush1.bf16.msra.mxu0 %v1762
    %1852 = vmatprep.subr.bf16.mxu0 0
    %1853 = vmatpush1.bf16.msra.mxu0 %v1763
    %1854 = vmatprep.subr.bf16.mxu0 0
    %1855 = vmatpush1.bf16.msra.mxu0 %v1764
    %1856 = vmatprep.subr.bf16.mxu0 0
    %1857 = vmatpush1.bf16.msra.mxu0 %v1765
    %1858 = vmatprep.subr.bf16.mxu0 0
    %1859 = vmatpush1.bf16.msra.mxu0 %v1766
    %1860 = vmatprep.subr.bf16.mxu0 0
    %1861 = vmatpush1.bf16.msra.mxu0 %v1767
    %1862 = vmatprep.subr.bf16.mxu0 0
    %1863 = vmatpush1.bf16.msra.mxu0 %v1768
    %1864 = vmatprep.subr.bf16.mxu0 0
    %1865 = vmatpush1.bf16.msra.mxu0 %v1769
    %1866 = vmatprep.subr.bf16.mxu0 0
    %1867 = vmatpush1.bf16.msra.mxu0 %v1770
    %1868 = vmatprep.subr.bf16.mxu0 0
    %1869 = vmatpush1.bf16.msra.mxu0 %v1771
    %1870 = vmatprep.subr.bf16.mxu0 0
    %1871 = vmatpush1.bf16.msra.mxu0 %v1772
    %1872 = vmatprep.subr.bf16.mxu0 0
    %1873 = vmatpush1.bf16.msra.mxu0 %v1773
    %1874 = vmatprep.subr.bf16.mxu0 0
    %1875 = vmatpush1.bf16.msra.mxu0 %v1774
    %1876 = vmatprep.subr.bf16.mxu0 0
    %1877 = vmatpush1.bf16.msra.mxu0 %v1775
    %1878 = vmatprep.subr.bf16.mxu0 0
    %1879 = vmatpush1.bf16.msra.mxu0 %v1776
    %1880 = vmatprep.subr.bf16.mxu0 0
    %1881 = vmatpush1.bf16.msra.mxu0 %v1777
    %1882 = vmatprep.mubr.bf16.mxu0 %v1546
    %1883 = vmatmul.mubr.bf16.gmra.mrb[0].mxu0 %v1545
    %v1884 = vpop.f32.mrb[0].mxu0
    %v1885 = vadd.f32 %v1845, %v1884
    %v1886 = vpop.f32.mrb[0].mxu0
    %v1887 = vpop.f32.mrb[0].mxu0
    %v1888 = vpop.f32.mrb[0].mxu0
    %1889 = vdwg.mxu0
    %1890 = vst [vmem:[#allocation10] sm:$0xff] %v1885
    // Predicated region
    $region46: #{tpu_custom_call.1} parent=1 // pred_check
      _
    $region47: #{tpu_custom_call.1} parent=1 // pred_check_branch
      %1892 = sbr.rel (0) target = $region49
    $region48: #{tpu_custom_call.1} parent=1 // pred_region
      %s1894 = ssub.s32 128, 128
      %1895 = vsyncadd [#allocation4], %s1894
      %s1897 = sshll.u32 [#allocation10], 4
      %s1898 = int_to_ptr.vmem [resolvable:$true] %s1897
      %1900 = dma.vmem_to_hbm [thread:$0]  %s1898, 128, %s7, [#allocation4]
    $region49: #{tpu_custom_call.1} parent=1 // pred_fallthru
      _
    // Predicated region
    $region50: #{tpu_custom_call.1} parent=1 // pred_check
      _
    $region51: #{tpu_custom_call.1} parent=1 // pred_check_branch
      %1902 = sbr.rel (0) target = $region53
    $region52: #{tpu_custom_call.1} parent=1 // pred_region
      %1903 = dma.done [#allocation4], 128
    $region53: #{tpu_custom_call.1} parent=1 // pred_fallthru
      _
    %1904 = vsyncpa [#allocation3], 1
    %1905 = vsyncpa [#allocation6], 1
    %1906 = vsyncpa [#allocation9], 1
    %1907 = vsyncpa [#allocation4], 1

</llo_original>
